<compile_context>
chip_gen: v6e
topology: v6e:2x2x1
jax: 0.10.0
libtpu: 0.0.40
codegen_flags: <defaults>
</compile_context>

<pallas_src>
import functools

import numpy as np
import jax
import jax.numpy as jnp
from jax.experimental import pallas as pl
from jax.experimental.pallas import tpu as pltpu


F_PAD = 128     # lane-dense padded width of the state / input features (dh + 10 <= 128)
OUT_PAD = 128   # lane-dense padded width of the derivative output      (dh + 1  <= 128)


# ----------------------------- parameters ---------------------------------- #

def make_params(dh, key):
    """Init matching the module: weight ~ N(0, 0.1), bias = 0.
    Weights stored as (in_features, out_features) so the kernel computes x @ W + b."""
    dims = [dh + 10, 128, 256, 256, 128, dh + 1]
    params = []
    for i in range(5):
        key, kw = jax.random.split(key)
        w = (0.1 * jax.random.normal(kw, (dims[i], dims[i + 1]))).astype(jnp.float32)
        b = jnp.zeros((1, dims[i + 1]), dtype=jnp.float32)
        params.append((w, b))
    return params


def pad_params(params, dh):
    """Zero-pad ragged dims to lane-dense (multiple-of-128) shapes; weights -> bf16."""
    logical_in = [dh + 10, 128, 256, 256, 128]
    padded_in = [F_PAD, 128, 256, 256, 128]
    logical_out = [128, 256, 256, 128, dh + 1]
    padded_out = [128, 256, 256, 128, OUT_PAD]
    out = []
    for (w, b), li, pi, lo, po in zip(params, logical_in, padded_in, logical_out, padded_out):
        wp = jnp.zeros((pi, po), jnp.float32).at[:li, :lo].set(w).astype(jnp.bfloat16)
        bp = jnp.zeros((1, po), jnp.float32).at[:, :lo].set(b)
        out.append((wp, bp))
    return out


# TODO(synk): gfunc is undefined in the source file; this deterministic 9-dim Fourier time
# encoding is a placeholder so concat(y, g) has exactly dh+10 features.  The in-kernel feature
# construction mirrors this exactly.
def gfunc(t):
    ks = jnp.arange(1, 6, dtype=jnp.float32)
    t = jnp.asarray(t, jnp.float32)
    return jnp.concatenate([jnp.sin(ks * t), jnp.cos(ks[:4] * t)]).astype(jnp.float32)


def pad_state(ys):
    """(..., dh+1) -> lane-dense (..., F_PAD) f32 with zero padding."""
    return jnp.pad(ys.astype(jnp.float32),
                   [(0, 0)] * (ys.ndim - 1) + [(0, F_PAD - ys.shape[-1])])


def unpad_state(ys_pad, dh):
    return ys_pad[..., :dh + 1]


# ------------------------------ Pallas kernel ------------------------------ #

def _ode_rhs_kernel(dh, t_ref, alpha_ref, y_ref,
                    w1, b1, w2, b2, w3, b3, w4, b4, w5, b5,
                    o_ref):
    t = t_ref[pl.program_id(0)]                 # per-stage time, SMEM scalar
    alpha = alpha_ref[0]                        # SMEM scalar (no recompile when alpha changes)

    lane = jax.lax.broadcasted_iota(jnp.int32, (1, F_PAD), 1)
    y = y_ref[0]                                # (TM, F_PAD) f32, cols [0:dh+1] hold the state
    y = jnp.where(lane <= dh, y, 0.0)           # force padded lanes to zero (defensive)

    # gfunc(t) built in-lane on the EUP: cols dh+1..dh+5 = sin(1..5 * t),
    #                                    cols dh+6..dh+9 = cos(1..4 * t), remaining lanes 0.
    f = lane - (dh + 1)
    k_sin = (f + 1).astype(jnp.float32)
    k_cos = (f - 4).astype(jnp.float32)
    g_val = jnp.where(f < 5, jnp.sin(k_sin * t), jnp.cos(k_cos * t))
    g_row = jnp.where((f >= 0) & (f < 9), g_val, 0.0)          # (1, F_PAD)

    hg = y + g_row                              # (TM, F_PAD): concat(y, g) laid out lane-dense

    # bf16 MXU matmuls with f32 accumulation; bias + ReLU in f32, then cast back to bf16 so
    # any spills of the 256-wide intermediates are half-width stores.
    h = jnp.dot(hg.astype(jnp.bfloat16), w1[...], preferred_element_type=jnp.float32) + b1[...]
    h = jnp.maximum(h, 0.0).astype(jnp.bfloat16)
    h = jnp.dot(h, w2[...], preferred_element_type=jnp.float32) + b2[...]
    h = jnp.maximum(h, 0.0).astype(jnp.bfloat16)
    h = jnp.dot(h, w3[...], preferred_element_type=jnp.float32) + b3[...]
    h = jnp.maximum(h, 0.0).astype(jnp.bfloat16)
    h = jnp.dot(h, w4[...], preferred_element_type=jnp.float32) + b4[...]
    h = jnp.maximum(h, 0.0).astype(jnp.bfloat16)
    out = jnp.dot(h, w5[...], preferred_element_type=jnp.float32) + b5[...]

    # Residual only touches the valid state lanes (y is zero elsewhere) and w5/b5 are
    # zero-padded, so output lanes dh+1.. are exact zeros: the padded derivative is itself a
    # valid lane-dense increment and needs no slicing between integrator steps.
    o_ref[0] = out - alpha * y


# ------------------------------- wrapper ------------------------------------ #

def _pick_tm(K, M):
    """Largest MXU-friendly row tile that keeps >= 2 grid steps (both v7x TensorCores busy);
    256 fills the 256-wide MXU on v6e/v7x, 128 matches the v5e MXU tile / small batches."""
    for tm in (256, 128):
        if M % tm == 0 and K * (M // tm) >= 2:
            return tm
    if M % 128 == 0:
        return 128
    assert M % 8 == 0, "M must be a multiple of 8"
    return M


def scipy_ode_rhs_padded(ts, ys_pad, padded_params, alpha, *, dh):
    """Batched ODE RHS, lane-dense in/out, one pallas_call for all K stages x M states.

    ts:      (K,) f32 -- one evaluation time per stage
    ys_pad:  (K, M, F_PAD) f32, cols [0:dh+1] hold y, remaining lanes zero
    returns: (K, M, OUT_PAD) f32, cols [0:dh+1] hold dy/dt, remaining lanes exactly zero
    """
    K, M, F = ys_pad.shape
    assert F == F_PAD and dh + 10 <= F_PAD and dh + 1 <= OUT_PAD
    tm = _pick_tm(K, M)

    ts = jnp.asarray(ts, jnp.float32).reshape(K)
    alpha_arr = jnp.reshape(jnp.asarray(alpha, jnp.float32), (1,))

    flat_inputs = [ts, alpha_arr, ys_pad]
    in_specs = [
        pl.BlockSpec(memory_space=pltpu.MemorySpace.SMEM),          # ts (K,)
        pl.BlockSpec(memory_space=pltpu.MemorySpace.SMEM),          # alpha (1,)
        pl.BlockSpec((1, tm, F_PAD), lambda k, i: (k, i, 0)),       # state tile
    ]
    for (w, b) in padded_params:
        flat_inputs.extend([w, b])
        # Constant index_map -> weights/biases DMA'd once and stay VMEM-resident over the grid.
        in_specs.append(pl.BlockSpec(w.shape, lambda k, i: (0, 0)))
        in_specs.append(pl.BlockSpec(b.shape, lambda k, i: (0, 0)))

    return pl.pallas_call(
        functools.partial(_ode_rhs_kernel, dh),
        out_shape=jax.ShapeDtypeStruct((K, M, OUT_PAD), jnp.float32),
        grid=(K, M // tm),
        in_specs=in_specs,
        out_specs=pl.BlockSpec((1, tm, OUT_PAD), lambda k, i: (k, i, 0)),
        compiler_params=pltpu.CompilerParams(
            dimension_semantics=("parallel", "parallel")),
    )(*flat_inputs)


# ------------------------------ reference ---------------------------------- #

def reference_rhs(ts, ys, padded_params, alpha, dh):
    """Pure-JAX reference on unpadded states; same bf16-weight / f32-accum precision path."""
    K, M, _ = ys.shape
    g = jax.vmap(gfunc)(jnp.asarray(ts, jnp.float32).reshape(K))         # (K, 9)
    hg = jnp.concatenate(
        [ys.astype(jnp.float32), jnp.broadcast_to(g[:, None, :], (K, M, 9))], axis=-1)
    hg = jnp.pad(hg, ((0, 0), (0, 0), (0, F_PAD - hg.shape[-1])))
    h = hg
    for i, (w, b) in enumerate(padded_params):
        h = jnp.dot(h.astype(jnp.bfloat16), w, preferred_element_type=jnp.float32) + b
        if i < 4:
            h = jnp.maximum(h, 0.0)
    return h[..., :dh + 1] - jnp.asarray(alpha, jnp.float32) * ys


# --------------------------------- main ------------------------------------ #

if __name__ == "__main__":
    dh = 32            # state dim dh+1 = 33, input features dh+10 = 42
    alpha = 0.1
    K, M = 2, 256      # 2 evaluation times x 256 ODE states in ONE pallas_call

    key = jax.random.PRNGKey(0)
    key, ky = jax.random.split(key)
    params = make_params(dh, key)
    padded = pad_params(params, dh)

    ys = 0.5 * jax.random.normal(ky, (K, M, dh + 1), dtype=jnp.float32)
    ts = jnp.array([0.3, 0.7], dtype=jnp.float32)

    rhs = jax.jit(functools.partial(scipy_ode_rhs_padded, dh=dh))

    ys_pad = pad_state(ys)
    dydt_pad = jax.block_until_ready(rhs(ts, ys_pad, padded, jnp.float32(alpha)))
    assert dydt_pad.shape == (K, M, OUT_PAD)

    ref = reference_rhs(ts, ys, padded, alpha, dh)
    # Padded lanes must come back as exact zeros (lane-dense state invariant).
    assert np.all(np.asarray(dydt_pad[..., dh + 1:]) == 0.0)
    # bf16 weights -> loosened tolerance (reference uses the same precision path).
    assert np.allclose(np.asarray(dydt_pad[..., :dh + 1]), np.asarray(ref),
                       rtol=2e-2, atol=2e-2), "Pallas kernel disagrees with JAX reference"

    # Tiny explicit-Euler rollout: the state stays lane-dense across RHS evaluations,
    # no pad/concat/slice between steps (slice only once at the very end).
    step = jnp.float32(0.01)
    y_pad = ys_pad[:1]                     # (1, M, F_PAD)
    y_ref = ys[:1]
    for s in range(3):
        t_s = jnp.reshape(jnp.float32(s) * step, (1,))
        y_pad = y_pad + step * rhs(t_s, y_pad, padded, jnp.float32(alpha))
        y_ref = y_ref + step * reference_rhs(t_s, y_ref, padded, alpha, dh)
    jax.block_until_ready(y_pad)
    assert np.allclose(np.asarray(unpad_state(y_pad, dh)), np.asarray(y_ref),
                       rtol=2e-2, atol=2e-2), "Euler rollout disagrees with JAX reference"

    print("KERNEL_OK")
</pallas_src>

<mosaic_0001>
module attributes {stable_mosaic.version = 11 : i64} {
  func.func @_ode_rhs_kernel(%arg0: i32, %arg1: i32, %arg2: memref<2xf32, #tpu.memory_space<smem>>, %arg3: memref<1xf32, #tpu.memory_space<smem>>, %arg4: memref<1x256x128xf32, #tpu.memory_space<vmem>>, %arg5: memref<128x128xbf16, #tpu.memory_space<vmem>>, %arg6: memref<1x128xf32, #tpu.memory_space<vmem>>, %arg7: memref<128x256xbf16, #tpu.memory_space<vmem>>, %arg8: memref<1x256xf32, #tpu.memory_space<vmem>>, %arg9: memref<256x256xbf16, #tpu.memory_space<vmem>>, %arg10: memref<1x256xf32, #tpu.memory_space<vmem>>, %arg11: memref<256x128xbf16, #tpu.memory_space<vmem>>, %arg12: memref<1x128xf32, #tpu.memory_space<vmem>>, %arg13: memref<128x128xbf16, #tpu.memory_space<vmem>>, %arg14: memref<1x128xf32, #tpu.memory_space<vmem>>, %arg15: memref<1x256x128xf32, #tpu.memory_space<vmem>>) attributes {dimension_semantics = [#tpu.dimension_semantics<parallel>, #tpu.dimension_semantics<parallel>], iteration_bounds = array<i64: 2, 1>, scalar_prefetch = 0 : i64, scratch_operands = 0 : i64, tpu.core_type = #tpu.core_type<tc>, window_params = [{transform_indices = @transform_0, window_bounds = array<i64: 2>}, {transform_indices = @transform_1, window_bounds = array<i64: 1>}, {transform_indices = @transform_2, window_bounds = array<i64: 1, 256, 128>}, {pipeline_mode = #tpu.pipeline_mode<synchronous>, transform_indices = @transform_3, window_bounds = array<i64: 128, 128>}, {pipeline_mode = #tpu.pipeline_mode<synchronous>, transform_indices = @transform_4, window_bounds = array<i64: 1, 128>}, {pipeline_mode = #tpu.pipeline_mode<synchronous>, transform_indices = @transform_5, window_bounds = array<i64: 128, 256>}, {pipeline_mode = #tpu.pipeline_mode<synchronous>, transform_indices = @transform_6, window_bounds = array<i64: 1, 256>}, {pipeline_mode = #tpu.pipeline_mode<synchronous>, transform_indices = @transform_7, window_bounds = array<i64: 256, 256>}, {pipeline_mode = #tpu.pipeline_mode<synchronous>, transform_indices = @transform_8, window_bounds = array<i64: 1, 256>}, {pipeline_mode = #tpu.pipeline_mode<synchronous>, transform_indices = @transform_9, window_bounds = array<i64: 256, 128>}, {pipeline_mode = #tpu.pipeline_mode<synchronous>, transform_indices = @transform_10, window_bounds = array<i64: 1, 128>}, {pipeline_mode = #tpu.pipeline_mode<synchronous>, transform_indices = @transform_11, window_bounds = array<i64: 128, 128>}, {pipeline_mode = #tpu.pipeline_mode<synchronous>, transform_indices = @transform_12, window_bounds = array<i64: 1, 128>}, {transform_indices = @transform_13, window_bounds = array<i64: 1, 256, 128>}]} {
    %0 = arith.index_cast %arg0 : i32 to index
    %1 = memref.load %arg2[%0] : memref<2xf32, #tpu.memory_space<smem>>
    %c0 = arith.constant 0 : index
    %2 = memref.load %arg3[%c0] : memref<1xf32, #tpu.memory_space<smem>>
    %3 = tpu.iota {dimensions = array<i32: 1>} : vector<1x128xi32>
    %c0_0 = arith.constant 0 : index
    %c0_1 = arith.constant 0 : index
    %c0_2 = arith.constant 0 : index
    %4 = vector.load %arg4[%c0_0, %c0_1, %c0_2] : memref<1x256x128xf32, #tpu.memory_space<vmem>>, vector<1x256x128xf32>
    %5 = vector.shape_cast %4 : vector<1x256x128xf32> to vector<256x128xf32>
    %c32_i32 = arith.constant 32 : i32
    %6 = vector.broadcast %c32_i32 : i32 to vector<1x128xi32>
    %7 = arith.cmpi sle, %3, %6 : vector<1x128xi32>
    %cst = arith.constant 0.000000e+00 : f32
    %8 = vector.shape_cast %7 : vector<1x128xi1> to vector<1x128xi1>
    %9 = vector.broadcast %8 : vector<1x128xi1> to vector<256x128xi1>
    %10 = vector.broadcast %cst : f32 to vector<256x128xf32>
    %11 = arith.select %9, %5, %10 : vector<256x128xi1>, vector<256x128xf32>
    %c33_i32 = arith.constant 33 : i32
    %12 = vector.broadcast %c33_i32 : i32 to vector<1x128xi32>
    %13 = arith.subi %3, %12 : vector<1x128xi32>
    %c1_i32 = arith.constant 1 : i32
    %14 = vector.broadcast %c1_i32 : i32 to vector<1x128xi32>
    %15 = arith.addi %13, %14 : vector<1x128xi32>
    %16 = arith.sitofp %15 : vector<1x128xi32> to vector<1x128xf32>
    %c4_i32 = arith.constant 4 : i32
    %17 = vector.broadcast %c4_i32 : i32 to vector<1x128xi32>
    %18 = arith.subi %13, %17 : vector<1x128xi32>
    %19 = arith.sitofp %18 : vector<1x128xi32> to vector<1x128xf32>
    %c5_i32 = arith.constant 5 : i32
    %20 = vector.broadcast %c5_i32 : i32 to vector<1x128xi32>
    %21 = arith.cmpi slt, %13, %20 : vector<1x128xi32>
    %22 = vector.broadcast %1 : f32 to vector<1x128xf32>
    %23 = arith.mulf %16, %22 : vector<1x128xf32>
    %24 = math.sin %23 : vector<1x128xf32>
    %25 = vector.broadcast %1 : f32 to vector<1x128xf32>
    %26 = arith.mulf %19, %25 : vector<1x128xf32>
    %27 = math.cos %26 : vector<1x128xf32>
    %28 = arith.select %21, %24, %27 : vector<1x128xi1>, vector<1x128xf32>
    %c0_i32 = arith.constant 0 : i32
    %29 = vector.broadcast %c0_i32 : i32 to vector<1x128xi32>
    %30 = arith.cmpi sge, %13, %29 : vector<1x128xi32>
    %c9_i32 = arith.constant 9 : i32
    %31 = vector.broadcast %c9_i32 : i32 to vector<1x128xi32>
    %32 = arith.cmpi slt, %13, %31 : vector<1x128xi32>
    %33 = arith.andi %30, %32 : vector<1x128xi1>
    %cst_3 = arith.constant 0.000000e+00 : f32
    %34 = vector.broadcast %cst_3 : f32 to vector<1x128xf32>
    %35 = arith.select %33, %28, %34 : vector<1x128xi1>, vector<1x128xf32>
    %36 = vector.broadcast %35 : vector<1x128xf32> to vector<256x128xf32>
    %37 = arith.addf %11, %36 : vector<256x128xf32>
    %38 = arith.truncf %37 : vector<256x128xf32> to vector<256x128xbf16>
    %c0_4 = arith.constant 0 : index
    %c0_5 = arith.constant 0 : index
    %39 = vector.load %arg5[%c0_4, %c0_5] : memref<128x128xbf16, #tpu.memory_space<vmem>>, vector<128x128xbf16>
    %cst_6 = arith.constant dense<0.000000e+00> : vector<256x128xf32>
    %40 = tpu.matmul %38, %39, %cst_6 {dimension_numbers = #tpu.dot_dimension_numbers<[1], [0], [0], [1], [0, 0, 1, 1], [], []>} : vector<256x128xbf16>, vector<128x128xbf16>, vector<256x128xf32> -> vector<256x128xf32>
    %c0_7 = arith.constant 0 : index
    %c0_8 = arith.constant 0 : index
    %41 = vector.load %arg6[%c0_7, %c0_8] : memref<1x128xf32, #tpu.memory_space<vmem>>, vector<1x128xf32>
    %42 = vector.broadcast %41 : vector<1x128xf32> to vector<256x128xf32>
    %43 = arith.addf %40, %42 : vector<256x128xf32>
    %cst_9 = arith.constant 0.000000e+00 : f32
    %44 = vector.broadcast %cst_9 : f32 to vector<256x128xf32>
    %45 = arith.maximumf %43, %44 : vector<256x128xf32>
    %46 = arith.truncf %45 : vector<256x128xf32> to vector<256x128xbf16>
    %c0_10 = arith.constant 0 : index
    %c0_11 = arith.constant 0 : index
    %47 = vector.load %arg7[%c0_10, %c0_11] : memref<128x256xbf16, #tpu.memory_space<vmem>>, vector<128x256xbf16>
    %cst_12 = arith.constant dense<0.000000e+00> : vector<256x256xf32>
    %48 = tpu.matmul %46, %47, %cst_12 {dimension_numbers = #tpu.dot_dimension_numbers<[1], [0], [0], [1], [0, 0, 1, 1], [], []>} : vector<256x128xbf16>, vector<128x256xbf16>, vector<256x256xf32> -> vector<256x256xf32>
    %c0_13 = arith.constant 0 : index
    %c0_14 = arith.constant 0 : index
    %49 = vector.load %arg8[%c0_13, %c0_14] : memref<1x256xf32, #tpu.memory_space<vmem>>, vector<1x256xf32>
    %50 = vector.broadcast %49 : vector<1x256xf32> to vector<256x256xf32>
    %51 = arith.addf %48, %50 : vector<256x256xf32>
    %cst_15 = arith.constant 0.000000e+00 : f32
    %52 = vector.broadcast %cst_15 : f32 to vector<256x256xf32>
    %53 = arith.maximumf %51, %52 : vector<256x256xf32>
    %54 = arith.truncf %53 : vector<256x256xf32> to vector<256x256xbf16>
    %c0_16 = arith.constant 0 : index
    %c0_17 = arith.constant 0 : index
    %55 = vector.load %arg9[%c0_16, %c0_17] : memref<256x256xbf16, #tpu.memory_space<vmem>>, vector<256x256xbf16>
    %cst_18 = arith.constant dense<0.000000e+00> : vector<256x256xf32>
    %56 = tpu.matmul %54, %55, %cst_18 {dimension_numbers = #tpu.dot_dimension_numbers<[1], [0], [0], [1], [0, 0, 1, 1], [], []>} : vector<256x256xbf16>, vector<256x256xbf16>, vector<256x256xf32> -> vector<256x256xf32>
    %c0_19 = arith.constant 0 : index
    %c0_20 = arith.constant 0 : index
    %57 = vector.load %arg10[%c0_19, %c0_20] : memref<1x256xf32, #tpu.memory_space<vmem>>, vector<1x256xf32>
    %58 = vector.broadcast %57 : vector<1x256xf32> to vector<256x256xf32>
    %59 = arith.addf %56, %58 : vector<256x256xf32>
    %cst_21 = arith.constant 0.000000e+00 : f32
    %60 = vector.broadcast %cst_21 : f32 to vector<256x256xf32>
    %61 = arith.maximumf %59, %60 : vector<256x256xf32>
    %62 = arith.truncf %61 : vector<256x256xf32> to vector<256x256xbf16>
    %c0_22 = arith.constant 0 : index
    %c0_23 = arith.constant 0 : index
    %63 = vector.load %arg11[%c0_22, %c0_23] : memref<256x128xbf16, #tpu.memory_space<vmem>>, vector<256x128xbf16>
    %cst_24 = arith.constant dense<0.000000e+00> : vector<256x128xf32>
    %64 = tpu.matmul %62, %63, %cst_24 {dimension_numbers = #tpu.dot_dimension_numbers<[1], [0], [0], [1], [0, 0, 1, 1], [], []>} : vector<256x256xbf16>, vector<256x128xbf16>, vector<256x128xf32> -> vector<256x128xf32>
    %c0_25 = arith.constant 0 : index
    %c0_26 = arith.constant 0 : index
    %65 = vector.load %arg12[%c0_25, %c0_26] : memref<1x128xf32, #tpu.memory_space<vmem>>, vector<1x128xf32>
    %66 = vector.broadcast %65 : vector<1x128xf32> to vector<256x128xf32>
    %67 = arith.addf %64, %66 : vector<256x128xf32>
    %cst_27 = arith.constant 0.000000e+00 : f32
    %68 = vector.broadcast %cst_27 : f32 to vector<256x128xf32>
    %69 = arith.maximumf %67, %68 : vector<256x128xf32>
    %70 = arith.truncf %69 : vector<256x128xf32> to vector<256x128xbf16>
    %c0_28 = arith.constant 0 : index
    %c0_29 = arith.constant 0 : index
    %71 = vector.load %arg13[%c0_28, %c0_29] : memref<128x128xbf16, #tpu.memory_space<vmem>>, vector<128x128xbf16>
    %cst_30 = arith.constant dense<0.000000e+00> : vector<256x128xf32>
    %72 = tpu.matmul %70, %71, %cst_30 {dimension_numbers = #tpu.dot_dimension_numbers<[1], [0], [0], [1], [0, 0, 1, 1], [], []>} : vector<256x128xbf16>, vector<128x128xbf16>, vector<256x128xf32> -> vector<256x128xf32>
    %c0_31 = arith.constant 0 : index
    %c0_32 = arith.constant 0 : index
    %73 = vector.load %arg14[%c0_31, %c0_32] : memref<1x128xf32, #tpu.memory_space<vmem>>, vector<1x128xf32>
    %74 = vector.broadcast %73 : vector<1x128xf32> to vector<256x128xf32>
    %75 = arith.addf %72, %74 : vector<256x128xf32>
    %76 = vector.broadcast %2 : f32 to vector<256x128xf32>
    %77 = arith.mulf %76, %11 : vector<256x128xf32>
    %78 = arith.subf %75, %77 : vector<256x128xf32>
    %c0_33 = arith.constant 0 : index
    %c0_34 = arith.constant 0 : index
    %c0_35 = arith.constant 0 : index
    %79 = vector.load %arg15[%c0_33, %c0_34, %c0_35] : memref<1x256x128xf32, #tpu.memory_space<vmem>>, vector<1x256x128xf32>
    %80 = vector.shape_cast %79 : vector<1x256x128xf32> to vector<256x128xf32>
    %81 = vector.shape_cast %78 : vector<256x128xf32> to vector<1x256x128xf32>
    tpu.vector_store %arg15[%c0_33, %c0_34, %c0_35], %81 {strides = array<i32>} : memref<1x256x128xf32, #tpu.memory_space<vmem>>, vector<1x256x128xf32>,
    return
  }
  func.func @transform_0(%arg0: i32, %arg1: i32) -> i32 {
    %c0_i32 = arith.constant 0 : i32
    %c0_i32_0 = arith.constant 0 : i32
    return %c0_i32 : i32
  }
  func.func @transform_1(%arg0: i32, %arg1: i32) -> i32 {
    %c0_i32 = arith.constant 0 : i32
    %c0_i32_0 = arith.constant 0 : i32
    return %c0_i32 : i32
  }
  func.func @transform_2(%arg0: i32, %arg1: i32) -> (i32, i32, i32) {
    %c0_i32 = arith.constant 0 : i32
    %c0_i32_0 = arith.constant 0 : i32
    return %arg0, %arg1, %c0_i32 : i32, i32, i32
  }
  func.func @transform_3(%arg0: i32, %arg1: i32) -> (i32, i32) {
    %c0_i32 = arith.constant 0 : i32
    %c0_i32_0 = arith.constant 0 : i32
    %c0_i32_1 = arith.constant 0 : i32
    return %c0_i32, %c0_i32_0 : i32, i32
  }
  func.func @transform_4(%arg0: i32, %arg1: i32) -> (i32, i32) {
    %c0_i32 = arith.constant 0 : i32
    %c0_i32_0 = arith.constant 0 : i32
    %c0_i32_1 = arith.constant 0 : i32
    return %c0_i32, %c0_i32_0 : i32, i32
  }
  func.func @transform_5(%arg0: i32, %arg1: i32) -> (i32, i32) {
    %c0_i32 = arith.constant 0 : i32
    %c0_i32_0 = arith.constant 0 : i32
    %c0_i32_1 = arith.constant 0 : i32
    return %c0_i32, %c0_i32_0 : i32, i32
  }
  func.func @transform_6(%arg0: i32, %arg1: i32) -> (i32, i32) {
    %c0_i32 = arith.constant 0 : i32
    %c0_i32_0 = arith.constant 0 : i32
    %c0_i32_1 = arith.constant 0 : i32
    return %c0_i32, %c0_i32_0 : i32, i32
  }
  func.func @transform_7(%arg0: i32, %arg1: i32) -> (i32, i32) {
    %c0_i32 = arith.constant 0 : i32
    %c0_i32_0 = arith.constant 0 : i32
    %c0_i32_1 = arith.constant 0 : i32
    return %c0_i32, %c0_i32_0 : i32, i32
  }
  func.func @transform_8(%arg0: i32, %arg1: i32) -> (i32, i32) {
    %c0_i32 = arith.constant 0 : i32
    %c0_i32_0 = arith.constant 0 : i32
    %c0_i32_1 = arith.constant 0 : i32
    return %c0_i32, %c0_i32_0 : i32, i32
  }
  func.func @transform_9(%arg0: i32, %arg1: i32) -> (i32, i32) {
    %c0_i32 = arith.constant 0 : i32
    %c0_i32_0 = arith.constant 0 : i32
    %c0_i32_1 = arith.constant 0 : i32
    return %c0_i32, %c0_i32_0 : i32, i32
  }
  func.func @transform_10(%arg0: i32, %arg1: i32) -> (i32, i32) {
    %c0_i32 = arith.constant 0 : i32
    %c0_i32_0 = arith.constant 0 : i32
    %c0_i32_1 = arith.constant 0 : i32
    return %c0_i32, %c0_i32_0 : i32, i32
  }
  func.func @transform_11(%arg0: i32, %arg1: i32) -> (i32, i32) {
    %c0_i32 = arith.constant 0 : i32
    %c0_i32_0 = arith.constant 0 : i32
    %c0_i32_1 = arith.constant 0 : i32
    return %c0_i32, %c0_i32_0 : i32, i32
  }
  func.func @transform_12(%arg0: i32, %arg1: i32) -> (i32, i32) {
    %c0_i32 = arith.constant 0 : i32
    %c0_i32_0 = arith.constant 0 : i32
    %c0_i32_1 = arith.constant 0 : i32
    return %c0_i32, %c0_i32_0 : i32, i32
  }
  func.func @transform_13(%arg0: i32, %arg1: i32) -> (i32, i32, i32) {
    %c0_i32 = arith.constant 0 : i32
    %c0_i32_0 = arith.constant 0 : i32
    return %arg0, %arg1, %c0_i32 : i32, i32, i32
  }
}

</mosaic_0001>

<llo_original>
// kernel: scipy_ode_rhs_padded.1
$region0: #{scipy_ode_rhs_padded.1}
  #allocation0 [shape = 'u32[]', space=smem, size = 0x4, offset = 0x4, fixed_abs, tag = 'smem constant byte address 0x4 - core index']
  #allocation1 [shape = 'u32[144,128]{1,0:T(1,128)}', space=vmem, size = 0x12000, scoped, tag = 'internal scratch']
  #allocation2 [shape = 'f32[1]{0:T(128)S(6)}', space=smem, size = 0x200, scoped, tag = 'scoped memory for scipy_ode_rhs_padded.1']
  %s0 = inlined_call_operand.vmem [shape: f32[2], index: 0, kind: input, shape index: {}]
  %s1 = inlined_call_operand.<no memory space> [shape: f32[1], index: 1, kind: input, shape index: {}]
  %s2 = inlined_call_operand.hbm [shape: f32[2,256,128], index: 2, kind: input, shape index: {}]
  %s3 = inlined_call_operand.hbm [shape: bf16[128,128], index: 3, kind: input, shape index: {}]
  %s4 = inlined_call_operand.vmem [shape: f32[1,128], index: 4, kind: input, shape index: {}]
  %s5 = inlined_call_operand.hbm [shape: bf16[128,256], index: 5, kind: input, shape index: {}]
  %s6 = inlined_call_operand.vmem [shape: f32[1,256], index: 6, kind: input, shape index: {}]
  %s7 = inlined_call_operand.hbm [shape: bf16[256,256], index: 7, kind: input, shape index: {}]
  %s8 = inlined_call_operand.vmem [shape: f32[1,256], index: 8, kind: input, shape index: {}]
  %s9 = inlined_call_operand.hbm [shape: bf16[256,128], index: 9, kind: input, shape index: {}]
  %s10 = inlined_call_operand.vmem [shape: f32[1,128], index: 10, kind: input, shape index: {}]
  %s11 = inlined_call_operand.hbm [shape: bf16[128,128], index: 11, kind: input, shape index: {}]
  %s12 = inlined_call_operand.vmem [shape: f32[1,128], index: 12, kind: input, shape index: {}]
  %s13 = inlined_call_operand.hbm [shape: f32[2,256,128], index: 13, kind: output, shape index: {}]
  %s14 = sld [smem:[#allocation0]]
  $region113: #{scipy_ode_rhs_padded.1} parent=0
    _
  %s16 = ssub.s32 1, %s14
  %s17 = scalar_select 0, %s16, %s14
  %18 = sst [smem:[#allocation2]] %s1
  $region1: #{scipy_ode_rhs_padded.1} parent=0
    #allocation3 [shape = 'u8[512]{0}', space=smem, size = 0x200, scoped, tag = 'input window, operand 0, single buffered']
    #allocation4 [shape = 's32[2]{0}', space=sflag, size = 0x8, scoped, tag = 'scoped memory for scipy_ode_rhs_padded.1']
    #allocation5 [shape = 's32[2]{0}', space=sflag, size = 0x8, scoped, tag = 'scoped memory for scipy_ode_rhs_padded.1']
    #allocation6 [shape = 's32[2]{0}', space=sflag, size = 0x8, scoped, tag = 'scoped memory for scipy_ode_rhs_padded.1']
    #allocation7 [shape = 'u8[262144]{0}', space=vmem, size = 0x40000, scoped, tag = 'input window, operand 2']
    #allocation8 [shape = 'u8[32768]{0}', space=vmem, size = 0x8000, scoped, tag = 'input window, operand 3, single buffered']
    #allocation9 [shape = 's32[1]{0}', space=sflag, size = 0x4, scoped, tag = 'scoped memory for scipy_ode_rhs_padded.1']
    #allocation10 [shape = 'u8[65536]{0}', space=vmem, size = 0x10000, scoped, tag = 'input window, operand 5, single buffered']
    #allocation11 [shape = 'u8[131072]{0}', space=vmem, size = 0x20000, scoped, tag = 'input window, operand 7, single buffered']
    #allocation12 [shape = 's32[1]{0}', space=sflag, size = 0x4, scoped, tag = 'scoped memory for scipy_ode_rhs_padded.1']
    #allocation13 [shape = 'u8[65536]{0}', space=vmem, size = 0x10000, scoped, tag = 'input window, operand 9, single buffered']
    #allocation14 [shape = 'u8[32768]{0}', space=vmem, size = 0x8000, scoped, tag = 'input window, operand 11, single buffered']
    #allocation15 [shape = 's32[1]{0}', space=sflag, size = 0x4, scoped, tag = 'scoped memory for scipy_ode_rhs_padded.1']
    #allocation16 [shape = 'u8[262144]{0}', space=vmem, size = 0x40000, scoped, tag = 'output window, operand 0']
    %19 = vsyncpa [#allocation6], 0
    %20 = vsyncpa [#allocation4], 0
    %s21 = scalar_lea.sflag [#allocation4], 1
    %22 = vsyncpa %s21, 0
    %23 = vsyncpa [#allocation9], 0
    %24 = vsyncpa [#allocation12], 0
    %25 = vsyncpa [#allocation15], 0
    %26 = vsyncpa [#allocation5], 0
    %s27 = scalar_lea.sflag [#allocation5], 1
    %28 = vsyncpa %s27, 0
    loop: start=0, step=1, limit=4
    $region2: #{scipy_ode_rhs_padded.1} parent=1 // loop_pre_header
      _
    $region3: #{scipy_ode_rhs_padded.1} parent=1 // loop_header
      %s30 = sphi 0, %s34
      %p31 = scmp.ge.s32.totalorder %s30, 4
      %s37 = sphi 0, %s49
      %s38 = sphi 0, %s45
      %s39 = sphi 0, %s37
      %s40 = sphi 0, %s38
      %s41 = sphi 0, %s39
      %s42 = sphi 0, %s40
      %s50 = sphi 0, %s50
      %s52 = sphi 0, %s50
      %s53 = sphi 0, %s52
      %s67 = sphi 0, %s53
      %s71 = sphi 0, %s71
      %s73 = sphi 0, %s71
      %s74 = sphi 0, %s73
      %s88 = sphi 0, %s74
      %s96 = sphi 0, %s98
      %s99 = sphi 0, %s96
      %s100 = sphi 0, %s99
      %s116 = sphi 0, %s100
      %s120 = sphi 0, %s120
      %s122 = sphi 0, %s120
      %s123 = sphi 0, %s122
      %s137 = sphi 0, %s123
      %s141 = sphi 0, %s141
      %s143 = sphi 0, %s141
      %s144 = sphi 0, %s143
      %s158 = sphi 0, %s144
      %s162 = sphi 0, %s162
      %s164 = sphi 0, %s162
      %s165 = sphi 0, %s164
      %s179 = sphi 0, %s165
      %s183 = sphi 0, %s183
      %s185 = sphi 0, %s183
      %s186 = sphi 0, %s185
      %s200 = sphi 0, %s186
      %s204 = sphi 0, %s204
      %s206 = sphi 0, %s204
      %s207 = sphi 0, %s206
      %s221 = sphi 0, %s207
      %s225 = sphi 0, %s225
      %s227 = sphi 0, %s225
      %s228 = sphi 0, %s227
      %s242 = sphi 0, %s228
      %s246 = sphi 0, %s246
      %s248 = sphi 0, %s246
      %s249 = sphi 0, %s248
      %s263 = sphi 0, %s249
      %s267 = sphi 0, %s267
      %s269 = sphi 0, %s267
      %s270 = sphi 0, %s269
      %s284 = sphi 0, %s270
      %s288 = sphi 0, %s288
      %s290 = sphi 0, %s288
      %s291 = sphi 0, %s290
      %s305 = sphi 0, %s291
      %s309 = sphi 0, %s309
      %s311 = sphi 0, %s309
      %s312 = sphi 0, %s311
      %s326 = sphi 0, %s312
      %s334 = sphi 0, %s336
      %s337 = sphi 0, %s334
      %s338 = sphi 0, %s337
      %s354 = sphi 0, %s338
    $region4: #{scipy_ode_rhs_padded.1} parent=1 // loop_header_branch
      %33 = sbr.rel (%p31) target = $region8
    $region5: #{scipy_ode_rhs_padded.1} parent=1 // loop_body
      %s35 = ssub.s32 %s30, 1
      %s36 = ssub.s32 %s30, 2
      %s43 = sadd.s32 1, %s38
      %p44 = scmp.ge.s32.totalorder %s43, 1
      %s45 = scalar_select %p44, 0, %s43
      %s46 = sadd.s32 1, %s37
      %s47 = scalar_select %p44, %s46, %s37
      %p48 = scmp.ge.s32.totalorder %s47, 2
      %s49 = scalar_select %p48, 0, %s47
      %s51 = sadd.s32 %s50, 1
      %p54 = scmp.eq.s32.totalorder %s30, 1
      %p55 = scmp.ne.s32.totalorder %s50, %s52
      %p56 = scmp.eq.s32.totalorder %s30, 0
      %p57 = por %p55, %p56
      %p58 = scmp.ne.s32.totalorder %s50, %s52
      %p59 = scmp.eq.s32.totalorder %s35, 1
      %p60 = por %p58, %p59
      %p61 = scmp.ne.s32.totalorder %s52, %s53
      %p62 = scmp.eq.s32.totalorder %s35, 0
      %p63 = por %p61, %p62
      %p64 = scmp.ne.s32.totalorder %s52, %s53
      %p65 = scmp.eq.s32.totalorder %s36, 1
      %p66 = por %p64, %p65
      %p68 = scmp.ne.s32.totalorder %s53, %s67
      %p69 = scmp.eq.s32.totalorder %s36, 0
      %p70 = por %p68, %p69
      %s72 = sadd.s32 %s71, 1
      %p75 = scmp.eq.s32.totalorder %s30, 1
      %p76 = scmp.ne.s32.totalorder %s71, %s73
      %p77 = scmp.eq.s32.totalorder %s30, 0
      %p78 = por %p76, %p77
      %p79 = scmp.ne.s32.totalorder %s71, %s73
      %p80 = scmp.eq.s32.totalorder %s35, 1
      %p81 = por %p79, %p80
      %p82 = scmp.ne.s32.totalorder %s73, %s74
      %p83 = scmp.eq.s32.totalorder %s35, 0
      %p84 = por %p82, %p83
      %p85 = scmp.ne.s32.totalorder %s73, %s74
      %p86 = scmp.eq.s32.totalorder %s36, 1
      %p87 = por %p85, %p86
      %p89 = scmp.ne.s32.totalorder %s74, %s88
      %p90 = scmp.eq.s32.totalorder %s36, 0
      %p91 = por %p89, %p90
      %s92 = ssub.s32 %s37, %s49
      %s93 = ssub.s32 %s38, %s45
      %s94 = sor.u32 %s92, %s93
      %p95 = scmp.eq.s32.totalorder %s94, 0
      %s97 = sadd.s32 %s96, 1
      %s98 = scalar_select %p95, %s96, %s97
      %p101 = pneg %p95
      %p102 = scmp.eq.s32.totalorder %s30, 1
      %p103 = por %p101, %p102
      %p104 = scmp.ne.s32.totalorder %s96, %s99
      %p105 = scmp.eq.s32.totalorder %s30, 0
      %p106 = por %p104, %p105
      %p107 = scmp.ne.s32.totalorder %s96, %s99
      %p108 = scmp.eq.s32.totalorder %s35, 1
      %p109 = por %p107, %p108
      %p110 = scmp.ne.s32.totalorder %s99, %s100
      %p111 = scmp.eq.s32.totalorder %s35, 0
      %p112 = por %p110, %p111
      %p113 = scmp.ne.s32.totalorder %s99, %s100
      %p114 = scmp.eq.s32.totalorder %s36, 1
      %p115 = por %p113, %p114
      %p117 = scmp.ne.s32.totalorder %s100, %s116
      %p118 = scmp.eq.s32.totalorder %s36, 0
      %p119 = por %p117, %p118
      %s121 = sadd.s32 %s120, 1
      %p124 = scmp.eq.s32.totalorder %s30, 1
      %p125 = scmp.ne.s32.totalorder %s120, %s122
      %p126 = scmp.eq.s32.totalorder %s30, 0
      %p127 = por %p125, %p126
      %p128 = scmp.ne.s32.totalorder %s120, %s122
      %p129 = scmp.eq.s32.totalorder %s35, 1
      %p130 = por %p128, %p129
      %p131 = scmp.ne.s32.totalorder %s122, %s123
      %p132 = scmp.eq.s32.totalorder %s35, 0
      %p133 = por %p131, %p132
      %p134 = scmp.ne.s32.totalorder %s122, %s123
      %p135 = scmp.eq.s32.totalorder %s36, 1
      %p136 = por %p134, %p135
      %p138 = scmp.ne.s32.totalorder %s123, %s137
      %p139 = scmp.eq.s32.totalorder %s36, 0
      %p140 = por %p138, %p139
      %s142 = sadd.s32 %s141, 1
      %p145 = scmp.eq.s32.totalorder %s30, 1
      %p146 = scmp.ne.s32.totalorder %s141, %s143
      %p147 = scmp.eq.s32.totalorder %s30, 0
      %p148 = por %p146, %p147
      %p149 = scmp.ne.s32.totalorder %s141, %s143
      %p150 = scmp.eq.s32.totalorder %s35, 1
      %p151 = por %p149, %p150
      %p152 = scmp.ne.s32.totalorder %s143, %s144
      %p153 = scmp.eq.s32.totalorder %s35, 0
      %p154 = por %p152, %p153
      %p155 = scmp.ne.s32.totalorder %s143, %s144
      %p156 = scmp.eq.s32.totalorder %s36, 1
      %p157 = por %p155, %p156
      %p159 = scmp.ne.s32.totalorder %s144, %s158
      %p160 = scmp.eq.s32.totalorder %s36, 0
      %p161 = por %p159, %p160
      %s163 = sadd.s32 %s162, 1
      %p166 = scmp.eq.s32.totalorder %s30, 1
      %p167 = scmp.ne.s32.totalorder %s162, %s164
      %p168 = scmp.eq.s32.totalorder %s30, 0
      %p169 = por %p167, %p168
      %p170 = scmp.ne.s32.totalorder %s162, %s164
      %p171 = scmp.eq.s32.totalorder %s35, 1
      %p172 = por %p170, %p171
      %p173 = scmp.ne.s32.totalorder %s164, %s165
      %p174 = scmp.eq.s32.totalorder %s35, 0
      %p175 = por %p173, %p174
      %p176 = scmp.ne.s32.totalorder %s164, %s165
      %p177 = scmp.eq.s32.totalorder %s36, 1
      %p178 = por %p176, %p177
      %p180 = scmp.ne.s32.totalorder %s165, %s179
      %p181 = scmp.eq.s32.totalorder %s36, 0
      %p182 = por %p180, %p181
      %s184 = sadd.s32 %s183, 1
      %p187 = scmp.eq.s32.totalorder %s30, 1
      %p188 = scmp.ne.s32.totalorder %s183, %s185
      %p189 = scmp.eq.s32.totalorder %s30, 0
      %p190 = por %p188, %p189
      %p191 = scmp.ne.s32.totalorder %s183, %s185
      %p192 = scmp.eq.s32.totalorder %s35, 1
      %p193 = por %p191, %p192
      %p194 = scmp.ne.s32.totalorder %s185, %s186
      %p195 = scmp.eq.s32.totalorder %s35, 0
      %p196 = por %p194, %p195
      %p197 = scmp.ne.s32.totalorder %s185, %s186
      %p198 = scmp.eq.s32.totalorder %s36, 1
      %p199 = por %p197, %p198
      %p201 = scmp.ne.s32.totalorder %s186, %s200
      %p202 = scmp.eq.s32.totalorder %s36, 0
      %p203 = por %p201, %p202
      %s205 = sadd.s32 %s204, 1
      %p208 = scmp.eq.s32.totalorder %s30, 1
      %p209 = scmp.ne.s32.totalorder %s204, %s206
      %p210 = scmp.eq.s32.totalorder %s30, 0
      %p211 = por %p209, %p210
      %p212 = scmp.ne.s32.totalorder %s204, %s206
      %p213 = scmp.eq.s32.totalorder %s35, 1
      %p214 = por %p212, %p213
      %p215 = scmp.ne.s32.totalorder %s206, %s207
      %p216 = scmp.eq.s32.totalorder %s35, 0
      %p217 = por %p215, %p216
      %p218 = scmp.ne.s32.totalorder %s206, %s207
      %p219 = scmp.eq.s32.totalorder %s36, 1
      %p220 = por %p218, %p219
      %p222 = scmp.ne.s32.totalorder %s207, %s221
      %p223 = scmp.eq.s32.totalorder %s36, 0
      %p224 = por %p222, %p223
      %s226 = sadd.s32 %s225, 1
      %p229 = scmp.eq.s32.totalorder %s30, 1
      %p230 = scmp.ne.s32.totalorder %s225, %s227
      %p231 = scmp.eq.s32.totalorder %s30, 0
      %p232 = por %p230, %p231
      %p233 = scmp.ne.s32.totalorder %s225, %s227
      %p234 = scmp.eq.s32.totalorder %s35, 1
      %p235 = por %p233, %p234
      %p236 = scmp.ne.s32.totalorder %s227, %s228
      %p237 = scmp.eq.s32.totalorder %s35, 0
      %p238 = por %p236, %p237
      %p239 = scmp.ne.s32.totalorder %s227, %s228
      %p240 = scmp.eq.s32.totalorder %s36, 1
      %p241 = por %p239, %p240
      %p243 = scmp.ne.s32.totalorder %s228, %s242
      %p244 = scmp.eq.s32.totalorder %s36, 0
      %p245 = por %p243, %p244
      %s247 = sadd.s32 %s246, 1
      %p250 = scmp.eq.s32.totalorder %s30, 1
      %p251 = scmp.ne.s32.totalorder %s246, %s248
      %p252 = scmp.eq.s32.totalorder %s30, 0
      %p253 = por %p251, %p252
      %p254 = scmp.ne.s32.totalorder %s246, %s248
      %p255 = scmp.eq.s32.totalorder %s35, 1
      %p256 = por %p254, %p255
      %p257 = scmp.ne.s32.totalorder %s248, %s249
      %p258 = scmp.eq.s32.totalorder %s35, 0
      %p259 = por %p257, %p258
      %p260 = scmp.ne.s32.totalorder %s248, %s249
      %p261 = scmp.eq.s32.totalorder %s36, 1
      %p262 = por %p260, %p261
      %p264 = scmp.ne.s32.totalorder %s249, %s263
      %p265 = scmp.eq.s32.totalorder %s36, 0
      %p266 = por %p264, %p265
      %s268 = sadd.s32 %s267, 1
      %p271 = scmp.eq.s32.totalorder %s30, 1
      %p272 = scmp.ne.s32.totalorder %s267, %s269
      %p273 = scmp.eq.s32.totalorder %s30, 0
      %p274 = por %p272, %p273
      %p275 = scmp.ne.s32.totalorder %s267, %s269
      %p276 = scmp.eq.s32.totalorder %s35, 1
      %p277 = por %p275, %p276
      %p278 = scmp.ne.s32.totalorder %s269, %s270
      %p279 = scmp.eq.s32.totalorder %s35, 0
      %p280 = por %p278, %p279
      %p281 = scmp.ne.s32.totalorder %s269, %s270
      %p282 = scmp.eq.s32.totalorder %s36, 1
      %p283 = por %p281, %p282
      %p285 = scmp.ne.s32.totalorder %s270, %s284
      %p286 = scmp.eq.s32.totalorder %s36, 0
      %p287 = por %p285, %p286
      %s289 = sadd.s32 %s288, 1
      %p292 = scmp.eq.s32.totalorder %s30, 1
      %p293 = scmp.ne.s32.totalorder %s288, %s290
      %p294 = scmp.eq.s32.totalorder %s30, 0
      %p295 = por %p293, %p294
      %p296 = scmp.ne.s32.totalorder %s288, %s290
      %p297 = scmp.eq.s32.totalorder %s35, 1
      %p298 = por %p296, %p297
      %p299 = scmp.ne.s32.totalorder %s290, %s291
      %p300 = scmp.eq.s32.totalorder %s35, 0
      %p301 = por %p299, %p300
      %p302 = scmp.ne.s32.totalorder %s290, %s291
      %p303 = scmp.eq.s32.totalorder %s36, 1
      %p304 = por %p302, %p303
      %p306 = scmp.ne.s32.totalorder %s291, %s305
      %p307 = scmp.eq.s32.totalorder %s36, 0
      %p308 = por %p306, %p307
      %s310 = sadd.s32 %s309, 1
      %p313 = scmp.eq.s32.totalorder %s30, 1
      %p314 = scmp.ne.s32.totalorder %s309, %s311
      %p315 = scmp.eq.s32.totalorder %s30, 0
      %p316 = por %p314, %p315
      %p317 = scmp.ne.s32.totalorder %s309, %s311
      %p318 = scmp.eq.s32.totalorder %s35, 1
      %p319 = por %p317, %p318
      %p320 = scmp.ne.s32.totalorder %s311, %s312
      %p321 = scmp.eq.s32.totalorder %s35, 0
      %p322 = por %p320, %p321
      %p323 = scmp.ne.s32.totalorder %s311, %s312
      %p324 = scmp.eq.s32.totalorder %s36, 1
      %p325 = por %p323, %p324
      %p327 = scmp.ne.s32.totalorder %s312, %s326
      %p328 = scmp.eq.s32.totalorder %s36, 0
      %p329 = por %p327, %p328
      %s330 = ssub.s32 %s37, %s49
      %s331 = ssub.s32 %s38, %s45
      %s332 = sor.u32 %s330, %s331
      %p333 = scmp.eq.s32.totalorder %s332, 0
      %s335 = sadd.s32 %s334, 1
      %s336 = scalar_select %p333, %s334, %s335
      %p339 = pneg %p333
      %p340 = scmp.eq.s32.totalorder %s30, 1
      %p341 = por %p339, %p340
      %p342 = scmp.ne.s32.totalorder %s334, %s337
      %p343 = scmp.eq.s32.totalorder %s30, 0
      %p344 = por %p342, %p343
      %p345 = scmp.ne.s32.totalorder %s334, %s337
      %p346 = scmp.eq.s32.totalorder %s35, 1
      %p347 = por %p345, %p346
      %p348 = scmp.ne.s32.totalorder %s337, %s338
      %p349 = scmp.eq.s32.totalorder %s35, 0
      %p350 = por %p348, %p349
      %p351 = scmp.ne.s32.totalorder %s337, %s338
      %p352 = scmp.eq.s32.totalorder %s36, 1
      %p353 = por %p351, %p352
      %p355 = scmp.ne.s32.totalorder %s338, %s354
      %p356 = scmp.eq.s32.totalorder %s36, 0
      %p357 = por %p355, %p356
      %p358 = scmp.le.s32.totalorder 1, %s30
      %p359 = scmp.lt.s32.totalorder %s30, 3
      %p360 = pnand %p358, %p359
      %p361 = pneg %p360
      // Predicated region
      $region9: #{scipy_ode_rhs_padded.1} parent=5 // pred_check
        _
      $region10: #{scipy_ode_rhs_padded.1} parent=5 // pred_check_branch
        %363 = sbr.rel (%p360) target = $region12
      $region11: #{scipy_ode_rhs_padded.1} parent=5 // pred_region
        %s364 = ssub.s32 %s30, 1
        // Predicated region
        $region13: #{scipy_ode_rhs_padded.1} parent=11 // pred_check
          %p365 = pneg %p63
        $region14: #{scipy_ode_rhs_padded.1} parent=11 // pred_check_branch
          %367 = sbr.rel (%p365) target = $region16
        $region15: #{scipy_ode_rhs_padded.1} parent=11 // pred_region
          %s369 = ssub.s32 16, 16
          %370 = vsyncadd [#allocation6], %s369
          %s372 = sshll.u32 %s0, 4
          %s373 = int_to_ptr.vmem [resolvable:$true] %s372
          %375 = dma.vmem_to_smem %s373, 16, [#allocation3], [#allocation6]
        $region16: #{scipy_ode_rhs_padded.1} parent=11 // pred_fallthru
          _
        // Predicated region
        $region17: #{scipy_ode_rhs_padded.1} parent=11 // pred_check
          %p376 = pneg %p84
        $region18: #{scipy_ode_rhs_padded.1} parent=11 // pred_check_branch
          %378 = sbr.rel (%p376) target = $region20
        $region19: #{scipy_ode_rhs_padded.1} parent=11 // pred_region
          _
        $region20: #{scipy_ode_rhs_padded.1} parent=11 // pred_fallthru
          _
        // Predicated region
        $region21: #{scipy_ode_rhs_padded.1} parent=11 // pred_check
          %p379 = pneg %p133
        $region22: #{scipy_ode_rhs_padded.1} parent=11 // pred_check_branch
          %381 = sbr.rel (%p379) target = $region24
        $region23: #{scipy_ode_rhs_padded.1} parent=11 // pred_region
          %s383 = ssub.s32 1024, 1024
          %384 = vsyncadd [#allocation9], %s383
          %s385 = sshll.u32 [#allocation8], 4
          %s386 = int_to_ptr.vmem [resolvable:$true] %s385
          %391 = dma.hbm_to_vmem [thread:$0]  %s3, 1024, %s386, [#allocation9], 64, 64, 4
        $region24: #{scipy_ode_rhs_padded.1} parent=11 // pred_fallthru
          _
        // Predicated region
        $region25: #{scipy_ode_rhs_padded.1} parent=11 // pred_check
          %p392 = pneg %p154
        $region26: #{scipy_ode_rhs_padded.1} parent=11 // pred_check_branch
          %394 = sbr.rel (%p392) target = $region28
        $region27: #{scipy_ode_rhs_padded.1} parent=11 // pred_region
          _
        $region28: #{scipy_ode_rhs_padded.1} parent=11 // pred_fallthru
          _
        // Predicated region
        $region29: #{scipy_ode_rhs_padded.1} parent=11 // pred_check
          %p395 = pneg %p175
        $region30: #{scipy_ode_rhs_padded.1} parent=11 // pred_check_branch
          %397 = sbr.rel (%p395) target = $region32
        $region31: #{scipy_ode_rhs_padded.1} parent=11 // pred_region
          %s399 = ssub.s32 2048, 2048
          %400 = vsyncadd [#allocation9], %s399
          %s401 = sshll.u32 [#allocation10], 4
          %s402 = int_to_ptr.vmem [resolvable:$true] %s401
          %407 = dma.hbm_to_vmem [thread:$0]  %s5, 2048, %s402, [#allocation9], 128, 128, 8
        $region32: #{scipy_ode_rhs_padded.1} parent=11 // pred_fallthru
          _
        // Predicated region
        $region33: #{scipy_ode_rhs_padded.1} parent=11 // pred_check
          %p408 = pneg %p196
        $region34: #{scipy_ode_rhs_padded.1} parent=11 // pred_check_branch
          %410 = sbr.rel (%p408) target = $region36
        $region35: #{scipy_ode_rhs_padded.1} parent=11 // pred_region
          _
        $region36: #{scipy_ode_rhs_padded.1} parent=11 // pred_fallthru
          _
        // Predicated region
        $region37: #{scipy_ode_rhs_padded.1} parent=11 // pred_check
          %p411 = pneg %p217
        $region38: #{scipy_ode_rhs_padded.1} parent=11 // pred_check_branch
          %413 = sbr.rel (%p411) target = $region40
        $region39: #{scipy_ode_rhs_padded.1} parent=11 // pred_region
          %s415 = ssub.s32 4096, 4096
          %416 = vsyncadd [#allocation12], %s415
          %s417 = sshll.u32 [#allocation11], 4
          %s418 = int_to_ptr.vmem [resolvable:$true] %s417
          %423 = dma.hbm_to_vmem [thread:$0]  %s7, 4096, %s418, [#allocation12], 128, 128, 8
        $region40: #{scipy_ode_rhs_padded.1} parent=11 // pred_fallthru
          _
        // Predicated region
        $region41: #{scipy_ode_rhs_padded.1} parent=11 // pred_check
          %p424 = pneg %p238
        $region42: #{scipy_ode_rhs_padded.1} parent=11 // pred_check_branch
          %426 = sbr.rel (%p424) target = $region44
        $region43: #{scipy_ode_rhs_padded.1} parent=11 // pred_region
          _
        $region44: #{scipy_ode_rhs_padded.1} parent=11 // pred_fallthru
          _
        // Predicated region
        $region45: #{scipy_ode_rhs_padded.1} parent=11 // pred_check
          %p427 = pneg %p259
        $region46: #{scipy_ode_rhs_padded.1} parent=11 // pred_check_branch
          %429 = sbr.rel (%p427) target = $region48
        $region47: #{scipy_ode_rhs_padded.1} parent=11 // pred_region
          %s431 = ssub.s32 2048, 2048
          %432 = vsyncadd [#allocation12], %s431
          %s433 = sshll.u32 [#allocation13], 4
          %s434 = int_to_ptr.vmem [resolvable:$true] %s433
          %439 = dma.hbm_to_vmem [thread:$0]  %s9, 2048, %s434, [#allocation12], 64, 64, 4
        $region48: #{scipy_ode_rhs_padded.1} parent=11 // pred_fallthru
          _
        // Predicated region
        $region49: #{scipy_ode_rhs_padded.1} parent=11 // pred_check
          %p440 = pneg %p280
        $region50: #{scipy_ode_rhs_padded.1} parent=11 // pred_check_branch
          %442 = sbr.rel (%p440) target = $region52
        $region51: #{scipy_ode_rhs_padded.1} parent=11 // pred_region
          _
        $region52: #{scipy_ode_rhs_padded.1} parent=11 // pred_fallthru
          _
        // Predicated region
        $region53: #{scipy_ode_rhs_padded.1} parent=11 // pred_check
          %p443 = pneg %p301
        $region54: #{scipy_ode_rhs_padded.1} parent=11 // pred_check_branch
          %445 = sbr.rel (%p443) target = $region56
        $region55: #{scipy_ode_rhs_padded.1} parent=11 // pred_region
          %s447 = ssub.s32 1024, 1024
          %448 = vsyncadd [#allocation15], %s447
          %s449 = sshll.u32 [#allocation14], 4
          %s450 = int_to_ptr.vmem [resolvable:$true] %s449
          %455 = dma.hbm_to_vmem [thread:$0]  %s11, 1024, %s450, [#allocation15], 64, 64, 4
        $region56: #{scipy_ode_rhs_padded.1} parent=11 // pred_fallthru
          _
        // Predicated region
        $region57: #{scipy_ode_rhs_padded.1} parent=11 // pred_check
          %p456 = pneg %p322
        $region58: #{scipy_ode_rhs_padded.1} parent=11 // pred_check_branch
          %458 = sbr.rel (%p456) target = $region60
        $region59: #{scipy_ode_rhs_padded.1} parent=11 // pred_region
          _
        $region60: #{scipy_ode_rhs_padded.1} parent=11 // pred_fallthru
          _
      $region12: #{scipy_ode_rhs_padded.1} parent=5 // pred_fallthru
        _
      %p459 = scmp.lt.s32.totalorder %s30, 2
      // Predicated region
      $region61: #{scipy_ode_rhs_padded.1} parent=5 // pred_check
        %p460 = pneg %p459
      $region62: #{scipy_ode_rhs_padded.1} parent=5 // pred_check_branch
        %462 = sbr.rel (%p460) target = $region64
      $region63: #{scipy_ode_rhs_padded.1} parent=5 // pred_region
        // Predicated region
        $region65: #{scipy_ode_rhs_padded.1} parent=63 // pred_check
          %p463 = pneg %p106
        $region66: #{scipy_ode_rhs_padded.1} parent=63 // pred_check_branch
          %465 = sbr.rel (%p463) target = $region68
        $region67: #{scipy_ode_rhs_padded.1} parent=63 // pred_region
          %s466 = sand.u32 %s96, 1
          %s467 = scalar_lea.sflag [#allocation4], %s466
          %s468 = sand.u32 %s96, 1
          %s469 = smul.addr %s468, 256
          %s470 = scalar_lea.vmem [#allocation7], %s469
          %s471 = smul.u32 32, %s38
          %s473 = ssub.s32 4096, 4096
          %474 = vsyncadd %s467, %s473
          %s475 = smul.addr %s37, 32
          %s476 = sadd.s32 %s471, %s475
          %s477 = smul.addr %s476, 128
          %s478 = scalar_lea.hbm %s2, %s477
          %s479 = sshll.u32 %s470, 4
          %s480 = int_to_ptr.vmem [resolvable:$true] %s479
          %485 = dma.hbm_to_vmem [thread:$0]  %s478, 4096, %s480, %s467, 128, 128, 8
        $region68: #{scipy_ode_rhs_padded.1} parent=63 // pred_fallthru
          _
      $region64: #{scipy_ode_rhs_padded.1} parent=5 // pred_fallthru
        _
      %p486 = scmp.le.s32.totalorder 1, %s30
      %p487 = scmp.lt.s32.totalorder %s30, 3
      %p488 = pnand %p486, %p487
      %p489 = pneg %p488
      // Predicated region
      $region69: #{scipy_ode_rhs_padded.1} parent=5 // pred_check
        _
      $region70: #{scipy_ode_rhs_padded.1} parent=5 // pred_check_branch
        %491 = sbr.rel (%p488) target = $region72
      $region71: #{scipy_ode_rhs_padded.1} parent=5 // pred_region
        %s492 = ssub.s32 %s30, 1
        // Predicated region
        $region73: #{scipy_ode_rhs_padded.1} parent=71 // pred_check
          %p493 = pneg %p63
        $region74: #{scipy_ode_rhs_padded.1} parent=71 // pred_check_branch
          %495 = sbr.rel (%p493) target = $region76
        $region75: #{scipy_ode_rhs_padded.1} parent=71 // pred_region
          %496 = dma.done [#allocation6], 16
        $region76: #{scipy_ode_rhs_padded.1} parent=71 // pred_fallthru
          _
        %s497 = sand.u32 %s99, 1
        %s498 = scalar_lea.sflag [#allocation4], %s497
        %s499 = sand.u32 %s99, 1
        %s500 = smul.addr %s499, 256
        %s501 = scalar_lea.vmem [#allocation7], %s500
        // Predicated region
        $region77: #{scipy_ode_rhs_padded.1} parent=71 // pred_check
          %p502 = pneg %p112
        $region78: #{scipy_ode_rhs_padded.1} parent=71 // pred_check_branch
          %504 = sbr.rel (%p502) target = $region80
        $region79: #{scipy_ode_rhs_padded.1} parent=71 // pred_region
          %505 = dma.done %s498, 4096
        $region80: #{scipy_ode_rhs_padded.1} parent=71 // pred_fallthru
          _
        // Predicated region
        $region81: #{scipy_ode_rhs_padded.1} parent=71 // pred_check
          %p506 = pneg %p133
        $region82: #{scipy_ode_rhs_padded.1} parent=71 // pred_check_branch
          %508 = sbr.rel (%p506) target = $region84
        $region83: #{scipy_ode_rhs_padded.1} parent=71 // pred_region
          %509 = dma.done [#allocation9], 1024
        $region84: #{scipy_ode_rhs_padded.1} parent=71 // pred_fallthru
          _
        // Predicated region
        $region85: #{scipy_ode_rhs_padded.1} parent=71 // pred_check
          %p510 = pneg %p175
        $region86: #{scipy_ode_rhs_padded.1} parent=71 // pred_check_branch
          %512 = sbr.rel (%p510) target = $region88
        $region87: #{scipy_ode_rhs_padded.1} parent=71 // pred_region
          %513 = dma.done [#allocation9], 2048
        $region88: #{scipy_ode_rhs_padded.1} parent=71 // pred_fallthru
          _
        // Predicated region
        $region89: #{scipy_ode_rhs_padded.1} parent=71 // pred_check
          %p514 = pneg %p217
        $region90: #{scipy_ode_rhs_padded.1} parent=71 // pred_check_branch
          %516 = sbr.rel (%p514) target = $region92
        $region91: #{scipy_ode_rhs_padded.1} parent=71 // pred_region
          %517 = dma.done [#allocation12], 4096
        $region92: #{scipy_ode_rhs_padded.1} parent=71 // pred_fallthru
          _
        // Predicated region
        $region93: #{scipy_ode_rhs_padded.1} parent=71 // pred_check
          %p518 = pneg %p259
        $region94: #{scipy_ode_rhs_padded.1} parent=71 // pred_check_branch
          %520 = sbr.rel (%p518) target = $region96
        $region95: #{scipy_ode_rhs_padded.1} parent=71 // pred_region
          %521 = dma.done [#allocation12], 2048
        $region96: #{scipy_ode_rhs_padded.1} parent=71 // pred_fallthru
          _
        // Predicated region
        $region97: #{scipy_ode_rhs_padded.1} parent=71 // pred_check
          %p522 = pneg %p301
        $region98: #{scipy_ode_rhs_padded.1} parent=71 // pred_check_branch
          %524 = sbr.rel (%p522) target = $region100
        $region99: #{scipy_ode_rhs_padded.1} parent=71 // pred_region
          %525 = dma.done [#allocation15], 1024
        $region100: #{scipy_ode_rhs_padded.1} parent=71 // pred_fallthru
          _
        %526 = sfence
        %p527 = pneg %p63
        %p528 = pneg %p60
        %p529 = pneg %p84
        %p530 = pneg %p81
        %s531 = sand.u32 %s99, 1
        %s532 = scalar_lea.sflag [#allocation4], %s531
        %s533 = sand.u32 %s99, 1
        %s534 = smul.addr %s533, 256
        %s535 = scalar_lea.vmem [#allocation7], %s534
        %p536 = pneg %p112
        %p537 = pneg %p109
        %p538 = pneg %p133
        %p539 = pneg %p130
        %p540 = pneg %p154
        %p541 = pneg %p151
        %p542 = pneg %p175
        %p543 = pneg %p172
        %p544 = pneg %p196
        %p545 = pneg %p193
        %p546 = pneg %p217
        %p547 = pneg %p214
        %p548 = pneg %p238
        %p549 = pneg %p235
        %p550 = pneg %p259
        %p551 = pneg %p256
        %p552 = pneg %p280
        %p553 = pneg %p277
        %p554 = pneg %p301
        %p555 = pneg %p298
        %p556 = pneg %p322
        %p557 = pneg %p319
        %p558 = pneg %p350
        %p559 = pneg %p347
        %s560 = sand.u32 %s337, 1
        %s561 = scalar_lea.sflag [#allocation5], %s560
        %s562 = sand.u32 %s337, 1
        %s563 = smul.addr %s562, 256
        %s564 = scalar_lea.vmem [#allocation16], %s563
        %s565 = smul.u32 32, %s40
        %s566 = smul.u32 32, %s40
        %s568 = sld [smem:[#allocation3 + %s39]]
        %s569 = sld [smem:[#allocation2]]
        %v570 = vlaneseq
        %v571 = vand.u32 %v570, 127
        %v572 = vld [vmem:[%s501] sm:$0xff]
        %v573 = vld [vmem:[%s501 + $0x8] sm:$0xff]
        %v574 = vld [vmem:[%s501 + $0x10] sm:$0xff]
        %v575 = vld [vmem:[%s501 + $0x18] sm:$0xff]
        %v576 = vld [vmem:[%s501 + $0x20] sm:$0xff]
        %v577 = vld [vmem:[%s501 + $0x28] sm:$0xff]
        %v578 = vld [vmem:[%s501 + $0x30] sm:$0xff]
        %v579 = vld [vmem:[%s501 + $0x38] sm:$0xff]
        %v580 = vld [vmem:[%s501 + $0x40] sm:$0xff]
        %v581 = vld [vmem:[%s501 + $0x48] sm:$0xff]
        %v582 = vld [vmem:[%s501 + $0x50] sm:$0xff]
        %v583 = vld [vmem:[%s501 + $0x58] sm:$0xff]
        %v584 = vld [vmem:[%s501 + $0x60] sm:$0xff]
        %v585 = vld [vmem:[%s501 + $0x68] sm:$0xff]
        %v586 = vld [vmem:[%s501 + $0x70] sm:$0xff]
        %v587 = vld [vmem:[%s501 + $0x78] sm:$0xff]
        %v588 = vld [vmem:[%s501 + $0x80] sm:$0xff]
        %v589 = vld [vmem:[%s501 + $0x88] sm:$0xff]
        %v590 = vld [vmem:[%s501 + $0x90] sm:$0xff]
        %v591 = vld [vmem:[%s501 + $0x98] sm:$0xff]
        %v592 = vld [vmem:[%s501 + $0xa0] sm:$0xff]
        %v593 = vld [vmem:[%s501 + $0xa8] sm:$0xff]
        %v594 = vld [vmem:[%s501 + $0xb0] sm:$0xff]
        %v595 = vld [vmem:[%s501 + $0xb8] sm:$0xff]
        %v596 = vld [vmem:[%s501 + $0xc0] sm:$0xff]
        %v597 = vld [vmem:[%s501 + $0xc8] sm:$0xff]
        %v598 = vld [vmem:[%s501 + $0xd0] sm:$0xff]
        %v599 = vld [vmem:[%s501 + $0xd8] sm:$0xff]
        %v600 = vld [vmem:[%s501 + $0xe0] sm:$0xff]
        %v601 = vld [vmem:[%s501 + $0xe8] sm:$0xff]
        %v602 = vld [vmem:[%s501 + $0xf0] sm:$0xff]
        %v603 = vld [vmem:[%s501 + $0xf8] sm:$0xff]
        %vm604 = vcmp.le.s32.totalorder %v571, 32
        %v605 = vsel %vm604, 1, 0
        %vm606 = vcmp.eq.s32.totalorder %v605, 1
        %v607 = vsel %vm606, %v572, 0.0
        %v608 = vsel %vm606, %v573, 0.0
        %v609 = vsel %vm606, %v574, 0.0
        %v610 = vsel %vm606, %v575, 0.0
        %v611 = vsel %vm606, %v576, 0.0
        %v612 = vsel %vm606, %v577, 0.0
        %v613 = vsel %vm606, %v578, 0.0
        %v614 = vsel %vm606, %v579, 0.0
        %v615 = vsel %vm606, %v580, 0.0
        %v616 = vsel %vm606, %v581, 0.0
        %v617 = vsel %vm606, %v582, 0.0
        %v618 = vsel %vm606, %v583, 0.0
        %v619 = vsel %vm606, %v584, 0.0
        %v620 = vsel %vm606, %v585, 0.0
        %v621 = vsel %vm606, %v586, 0.0
        %v622 = vsel %vm606, %v587, 0.0
        %v623 = vsel %vm606, %v588, 0.0
        %v624 = vsel %vm606, %v589, 0.0
        %v625 = vsel %vm606, %v590, 0.0
        %v626 = vsel %vm606, %v591, 0.0
        %v627 = vsel %vm606, %v592, 0.0
        %v628 = vsel %vm606, %v593, 0.0
        %v629 = vsel %vm606, %v594, 0.0
        %v630 = vsel %vm606, %v595, 0.0
        %v631 = vsel %vm606, %v596, 0.0
        %v632 = vsel %vm606, %v597, 0.0
        %v633 = vsel %vm606, %v598, 0.0
        %v634 = vsel %vm606, %v599, 0.0
        %v635 = vsel %vm606, %v600, 0.0
        %v636 = vsel %vm606, %v601, 0.0
        %v637 = vsel %vm606, %v602, 0.0
        %v638 = vsel %vm606, %v603, 0.0
        %v639 = vsub.s32 %v571, 33
        %v640 = vadd.s32 %v639, 1
        %v641 = vcvt.s32.f32 %v640
        %v642 = vsub.s32 %v639, 4
        %v643 = vcvt.s32.f32 %v642
        %vm644 = vcmp.lt.s32.totalorder %v639, 5
        %v645 = vstv %s568
        %v646 = vmul.f32 %v641, %v645
        %v647 = vand.u32 2147483647, %v646
        %vm648 = vcmp.le.f32.partialorder %v647, 0.7853982
        %vm649 = vcmp.lt.s32.totalorder %v646, 0
        %v650 = vand.u32 %v646, 2139095040
        %v651 = vshrl.u32 %v650, 23
        %v652 = vsub.s32 %v651, 127
        %v653 = vand.u32 2147483647, %v646
        %v654 = vand.u32 %v653, 8388607
        %v655 = vor.u32 %v654, 8388608
        %v656 = vsub.s32 0, %v655
        %v657 = vadd.s32 %v652, 1
        %vm658 = vcmp.gt.s32.totalorder %v657, 0
        %v659 = vsel %vm658, %v657, 0
        %v660 = vshrl.u32 %v659, 5
        %v661 = vand.u32 %v659, 31
        %v662 = vsub.s32 32, %v661
        %v663 = vshrl.u32 683565275, %v662
        %v664 = vshll.u32 683565275, %v661
        %v665 = vshrl.u32 2475754826, %v662
        %v666 = vor.u32 %v664, %v665
        %v667 = vshll.u32 2475754826, %v661
        %v668 = vshrl.u32 2131351028, %v662
        %v669 = vor.u32 %v667, %v668
        %v670 = vshll.u32 2131351028, %v661
        %v671 = vshrl.u32 2102212464, %v662
        %v672 = vor.u32 %v670, %v671
        %v673 = vshll.u32 2102212464, %v661
        %v674 = vshrl.u32 920167782, %v662
        %v675 = vor.u32 %v673, %v674
        %v676 = vshll.u32 920167782, %v661
        %v677 = vshrl.u32 1326507024, %v662
        %v678 = vor.u32 %v676, %v677
        %vm679 = vcmp.lt.s32.totalorder %v660, 1
        %vm680 = vcmp.lt.s32.totalorder %v660, 2
        %vm681 = vcmp.lt.s32.totalorder %v660, 3
        %vm682 = vcmp.lt.s32.totalorder %v660, 4
        %v683 = vsel %vm679, %v663, %v666
        %v684 = vsel %vm682, %v672, 2102212464
        %v685 = vsel %vm681, %v669, %v684
        %v686 = vsel %vm680, %v683, %v685
        %v687 = vsel %vm679, %v666, %v669
        %v688 = vsel %vm682, %v675, 920167782
        %v689 = vsel %vm681, %v672, %v688
        %v690 = vsel %vm680, %v687, %v689
        %v691 = vsel %vm679, %v669, %v672
        %v692 = vsel %vm682, %v678, 1326507024
        %v693 = vsel %vm681, %v675, %v692
        %v694 = vsel %vm680, %v691, %v693
        %v695 = vshll.u32 %v655, 8
        %v696 = vmul.u32.u64.compose %v695, %v694
        %v697 = vextract.low.u32 %v696
        %v698 = vextract.high.u32 %v696
        %v699 = vmul.u32.u64.compose %v695, %v690
        %v700 = vextract.low.u32 %v699
        %v701 = vextract.high.u32 %v699
        %v702 = vmul.u32 %v695, %v686
        %v703 = vadd.s32 %v698, %v700
        %vm704 = vc.u32 %v698, %v700
        %v705 = vadd.s32 %v701, 1
        %v706 = vsel %vm704, %v705, %v701
        %v707 = vadd.s32 %v702, %v706
        %v708 = vadd.s32 %v707, 536870912
        %v709 = vshrl.u32 %v708, 30
        %v710 = vshll.u32 %v709, 30
        %v711 = vsub.s32 %v707, %v710
        %vm712 = vcmp.lt.s32.totalorder %v711, 0
        %v713 = vsub.s32 0, %v711
        %v714 = vsel %vm712, %v713, %v711
        %v715 = vclz %v714
        %v716 = vsub.s32 %v715, 2
        %vm717 = vcmp.gt.s32.totalorder 0, %v716
        %v718 = vsel %vm717, 0, %v716
        %v719 = vsub.s32 32, %v718
        %v720 = vshll.u32 %v711, %v718
        %v721 = vshrl.u32 %v703, %v719
        %v722 = vor.u32 %v720, %v721
        %v723 = vsub.s32 4294967266, %v718
        %v724 = vadd.s32 %v723, 127
        %v725 = vshll.u32 %v724, 23
        %v726 = vor.u32 4788187, %v725
        %v727 = vand.u32 2147483647, %v726
        %v729 = vcvt.s32.f32 %v722
        %v730 = vmul.f32 %v729, %v727
        %v731 = vxor.u32 %v730, 2147483648
        %v732 = vsel %vm649, %v731, %v730
        %v733 = vsub.s32 4, %v709
        %v734 = vsel %vm649, %v733, %v709
        %v735 = vsel %vm648, %v646, %v732
        %v736 = vsel %vm648, 0, %v734
        %v737 = vcosq.f32.pop %v735
        %v738 = vsinq.f32.pop %v735
        %vm739 = vweird.f32 %v646
        %v740 = vadd.s32 %v736, 3
        %v741 = vand.u32 %v740, 3
        %vm742 = vcmp.lt.s32.totalorder %v741, 2
        %vm743 = vcmp.eq.s32.totalorder %v741, 0
        %v744 = vxor.u32 %v738, 2147483648
        %v745 = vsel %vm743, %v737, %v744
        %vm746 = vcmp.eq.s32.totalorder %v741, 2
        %v747 = vxor.u32 %v737, 2147483648
        %v748 = vsel %vm746, %v747, %v738
        %v749 = vsel %vm742, %v745, %v748
        %v750 = vsel %vm739, nan, %v749
        %v751 = vmul.f32 %v643, %v645
        %v752 = vand.u32 2147483647, %v751
        %vm753 = vcmp.le.f32.partialorder %v752, 0.7853982
        %vm754 = vcmp.lt.s32.totalorder %v751, 0
        %v755 = vand.u32 %v751, 2139095040
        %v756 = vshrl.u32 %v755, 23
        %v757 = vsub.s32 %v756, 127
        %v758 = vand.u32 2147483647, %v751
        %v759 = vand.u32 %v758, 8388607
        %v760 = vor.u32 %v759, 8388608
        %v761 = vsub.s32 0, %v760
        %v762 = vadd.s32 %v757, 1
        %vm763 = vcmp.gt.s32.totalorder %v762, 0
        %v764 = vsel %vm763, %v762, 0
        %v765 = vshrl.u32 %v764, 5
        %v766 = vand.u32 %v764, 31
        %v767 = vsub.s32 32, %v766
        %v768 = vshrl.u32 683565275, %v767
        %v769 = vshll.u32 683565275, %v766
        %v770 = vshrl.u32 2475754826, %v767
        %v771 = vor.u32 %v769, %v770
        %v772 = vshll.u32 2475754826, %v766
        %v773 = vshrl.u32 2131351028, %v767
        %v774 = vor.u32 %v772, %v773
        %v775 = vshll.u32 2131351028, %v766
        %v776 = vshrl.u32 2102212464, %v767
        %v777 = vor.u32 %v775, %v776
        %v778 = vshll.u32 2102212464, %v766
        %v779 = vshrl.u32 920167782, %v767
        %v780 = vor.u32 %v778, %v779
        %v781 = vshll.u32 920167782, %v766
        %v782 = vshrl.u32 1326507024, %v767
        %v783 = vor.u32 %v781, %v782
        %vm784 = vcmp.lt.s32.totalorder %v765, 1
        %vm785 = vcmp.lt.s32.totalorder %v765, 2
        %vm786 = vcmp.lt.s32.totalorder %v765, 3
        %vm787 = vcmp.lt.s32.totalorder %v765, 4
        %v788 = vsel %vm784, %v768, %v771
        %v789 = vsel %vm787, %v777, 2102212464
        %v790 = vsel %vm786, %v774, %v789
        %v791 = vsel %vm785, %v788, %v790
        %v792 = vsel %vm784, %v771, %v774
        %v793 = vsel %vm787, %v780, 920167782
        %v794 = vsel %vm786, %v777, %v793
        %v795 = vsel %vm785, %v792, %v794
        %v796 = vsel %vm784, %v774, %v777
        %v797 = vsel %vm787, %v783, 1326507024
        %v798 = vsel %vm786, %v780, %v797
        %v799 = vsel %vm785, %v796, %v798
        %v800 = vshll.u32 %v760, 8
        %v801 = vmul.u32.u64.compose %v800, %v799
        %v802 = vextract.low.u32 %v801
        %v803 = vextract.high.u32 %v801
        %v804 = vmul.u32.u64.compose %v800, %v795
        %v805 = vextract.low.u32 %v804
        %v806 = vextract.high.u32 %v804
        %v807 = vmul.u32 %v800, %v791
        %v808 = vadd.s32 %v803, %v805
        %vm809 = vc.u32 %v803, %v805
        %v810 = vadd.s32 %v806, 1
        %v811 = vsel %vm809, %v810, %v806
        %v812 = vadd.s32 %v807, %v811
        %v813 = vadd.s32 %v812, 536870912
        %v814 = vshrl.u32 %v813, 30
        %v815 = vshll.u32 %v814, 30
        %v816 = vsub.s32 %v812, %v815
        %vm817 = vcmp.lt.s32.totalorder %v816, 0
        %v818 = vsub.s32 0, %v816
        %v819 = vsel %vm817, %v818, %v816
        %v820 = vclz %v819
        %v821 = vsub.s32 %v820, 2
        %vm822 = vcmp.gt.s32.totalorder 0, %v821
        %v823 = vsel %vm822, 0, %v821
        %v824 = vsub.s32 32, %v823
        %v825 = vshll.u32 %v816, %v823
        %v826 = vshrl.u32 %v808, %v824
        %v827 = vor.u32 %v825, %v826
        %v828 = vsub.s32 4294967266, %v823
        %v829 = vadd.s32 %v828, 127
        %v830 = vshll.u32 %v829, 23
        %v831 = vor.u32 4788187, %v830
        %v832 = vand.u32 2147483647, %v831
        %v834 = vcvt.s32.f32 %v827
        %v835 = vmul.f32 %v834, %v832
        %v836 = vxor.u32 %v835, 2147483648
        %v837 = vsel %vm754, %v836, %v835
        %v838 = vsub.s32 4, %v814
        %v839 = vsel %vm754, %v838, %v814
        %v840 = vsel %vm753, %v751, %v837
        %v841 = vsel %vm753, 0, %v839
        %v842 = vcosq.f32.pop %v840
        %v843 = vsinq.f32.pop %v840
        %vm844 = vweird.f32 %v751
        %v845 = vand.u32 %v841, 3
        %vm846 = vcmp.lt.s32.totalorder %v845, 2
        %vm847 = vcmp.eq.s32.totalorder %v845, 0
        %v848 = vxor.u32 %v843, 2147483648
        %v849 = vsel %vm847, %v842, %v848
        %vm850 = vcmp.eq.s32.totalorder %v845, 2
        %v851 = vxor.u32 %v842, 2147483648
        %v852 = vsel %vm850, %v851, %v843
        %v853 = vsel %vm846, %v849, %v852
        %v854 = vsel %vm844, nan, %v853
        %v855 = vsel %vm644, %v750, %v854
        %vm856 = vcmp.ge.s32.totalorder %v639, 0
        %vm857 = vcmp.lt.s32.totalorder %v639, 9
        %vm858 = vmand %vm856, %vm857
        %v859 = vsel %vm858, %v855, 0.0
        %v860 = vadd.f32 %v607, %v859
        %v861 = vadd.f32 %v608, %v859
        %v862 = vadd.f32 %v609, %v859
        %v863 = vadd.f32 %v610, %v859
        %v864 = vadd.f32 %v611, %v859
        %v865 = vadd.f32 %v612, %v859
        %v866 = vadd.f32 %v613, %v859
        %v867 = vadd.f32 %v614, %v859
        %v868 = vadd.f32 %v615, %v859
        %v869 = vadd.f32 %v616, %v859
        %v870 = vadd.f32 %v617, %v859
        %v871 = vadd.f32 %v618, %v859
        %v872 = vadd.f32 %v619, %v859
        %v873 = vadd.f32 %v620, %v859
        %v874 = vadd.f32 %v621, %v859
        %v875 = vadd.f32 %v622, %v859
        %v876 = vadd.f32 %v623, %v859
        %v877 = vadd.f32 %v624, %v859
        %v878 = vadd.f32 %v625, %v859
        %v879 = vadd.f32 %v626, %v859
        %v880 = vadd.f32 %v627, %v859
        %v881 = vadd.f32 %v628, %v859
        %v882 = vadd.f32 %v629, %v859
        %v883 = vadd.f32 %v630, %v859
        %v884 = vadd.f32 %v631, %v859
        %v885 = vadd.f32 %v632, %v859
        %v886 = vadd.f32 %v633, %v859
        %v887 = vadd.f32 %v634, %v859
        %v888 = vadd.f32 %v635, %v859
        %v889 = vadd.f32 %v636, %v859
        %v890 = vadd.f32 %v637, %v859
        %v891 = vadd.f32 %v638, %v859
        %v892 = vpack.c.bf16 %v861, %v860
        %v893 = vpack.c.bf16 %v863, %v862
        %v894 = vpack.c.bf16 %v865, %v864
        %v895 = vpack.c.bf16 %v867, %v866
        %v896 = vpack.c.bf16 %v869, %v868
        %v897 = vpack.c.bf16 %v871, %v870
        %v898 = vpack.c.bf16 %v873, %v872
        %v899 = vpack.c.bf16 %v875, %v874
        %v900 = vpack.c.bf16 %v877, %v876
        %v901 = vpack.c.bf16 %v879, %v878
        %v902 = vpack.c.bf16 %v881, %v880
        %v903 = vpack.c.bf16 %v883, %v882
        %v904 = vpack.c.bf16 %v885, %v884
        %v905 = vpack.c.bf16 %v887, %v886
        %v906 = vpack.c.bf16 %v889, %v888
        %v907 = vpack.c.bf16 %v891, %v890
        %v908 = vld [vmem:[#allocation8] sm:$0xf]
        %v909 = vld [vmem:[#allocation8 + $0x4] sm:$0xf]
        %v910 = vld [vmem:[#allocation8 + $0x8] sm:$0xf]
        %v911 = vld [vmem:[#allocation8 + $0xc] sm:$0xf]
        %v912 = vld [vmem:[#allocation8 + $0x10] sm:$0xf]
        %v913 = vld [vmem:[#allocation8 + $0x14] sm:$0xf]
        %v914 = vld [vmem:[#allocation8 + $0x18] sm:$0xf]
        %v915 = vld [vmem:[#allocation8 + $0x1c] sm:$0xf]
        %v916 = vld [vmem:[#allocation8 + $0x20] sm:$0xf]
        %v917 = vld [vmem:[#allocation8 + $0x24] sm:$0xf]
        %v918 = vld [vmem:[#allocation8 + $0x28] sm:$0xf]
        %v919 = vld [vmem:[#allocation8 + $0x2c] sm:$0xf]
        %v920 = vld [vmem:[#allocation8 + $0x30] sm:$0xf]
        %v921 = vld [vmem:[#allocation8 + $0x34] sm:$0xf]
        %v922 = vld [vmem:[#allocation8 + $0x38] sm:$0xf]
        %v923 = vld [vmem:[#allocation8 + $0x3c] sm:$0xf]
        %v924 = vld [vmem:[%s4] sm:$0x1]
        %v926 = vlaneseq
        %v927 = vshrl.u32 %v926, 7
        %v928 = vsub.s32 0, %v927
        %v929 = vrot.slane %v924, %v928
        %v947 = vunpack.c.l.b16 %v908
        %v948 = vunpack.c.l.b16 %v909
        %v949 = vunpack.c.l.b16 %v910
        %v950 = vunpack.c.l.b16 %v911
        %v951 = vunpack.c.l.b16 %v912
        %v952 = vunpack.c.l.b16 %v913
        %v953 = vunpack.c.l.b16 %v914
        %v954 = vunpack.c.l.b16 %v915
        %v955 = vunpack.c.l.b16 %v916
        %v956 = vunpack.c.l.b16 %v917
        %v957 = vunpack.c.l.b16 %v918
        %v958 = vunpack.c.l.b16 %v919
        %v959 = vunpack.c.l.b16 %v920
        %v960 = vunpack.c.l.b16 %v921
        %v961 = vunpack.c.l.b16 %v922
        %v962 = vunpack.c.l.b16 %v923
        %v963 = vpack.c.b16 %v948, %v947
        %v964 = vpack.c.b16 %v950, %v949
        %v965 = vpack.c.b16 %v952, %v951
        %v966 = vpack.c.b16 %v954, %v953
        %v967 = vpack.c.b16 %v956, %v955
        %v968 = vpack.c.b16 %v958, %v957
        %v969 = vpack.c.b16 %v960, %v959
        %v970 = vpack.c.b16 %v962, %v961
        %979 = vmatprep.subr.bf16.mxu0 0
        %980 = vmatpush1.bf16.msra.mxu0 %v970
        %981 = vmatprep.subr.bf16.mxu0 0
        %982 = vmatpush1.bf16.msra.mxu0 %v969
        %983 = vmatprep.subr.bf16.mxu0 0
        %984 = vmatpush1.bf16.msra.mxu0 %v968
        %985 = vmatprep.subr.bf16.mxu0 0
        %986 = vmatpush1.bf16.msra.mxu0 %v967
        %987 = vmatprep.subr.bf16.mxu0 0
        %988 = vmatpush1.bf16.msra.mxu0 %v966
        %989 = vmatprep.subr.bf16.mxu0 0
        %990 = vmatpush1.bf16.msra.mxu0 %v965
        %991 = vmatprep.subr.bf16.mxu0 0
        %992 = vmatpush1.bf16.msra.mxu0 %v964
        %993 = vmatprep.subr.bf16.mxu0 0
        %994 = vmatpush1.bf16.msra.mxu0 %v963
        %995 = vmatprep.subr.bf16.mxu0 0
        %996 = vmatpush2.bf16.msra.mxu0 0
        %997 = vmatprep.subr.bf16.mxu0 0
        %998 = vmatpush2.bf16.msra.mxu0 0
        %999 = vmatprep.subr.bf16.mxu0 0
        %1000 = vmatpush2.bf16.msra.mxu0 0
        %1001 = vmatprep.subr.bf16.mxu0 0
        %1002 = vmatpush2.bf16.msra.mxu0 0
        %1003 = vmatprep.subr.bf16.mxu0 0
        %1004 = vmatpush2.bf16.msra.mxu0 0
        %1005 = vmatprep.subr.bf16.mxu0 0
        %1006 = vmatpush2.bf16.msra.mxu0 0
        %1007 = vmatprep.subr.bf16.mxu0 0
        %1008 = vmatpush2.bf16.msra.mxu0 0
        %1009 = vmatprep.subr.bf16.mxu0 0
        %1010 = vmatpush2.bf16.msra.mxu0 0
        %1011 = vmatprep.mubr.bf16.mxu0 0
        %1012 = vmatmul.mubr.bf16.gmra.mxu0 %v892
        %v1013 = vpop.f32.mrf.mxu0
        %v1014 = vadd.f32 %v929, %v1013
        %v1015 = vpop.f32.mrf.mxu0
        %v1016 = vpop.f32.mrf.mxu0
        %v1017 = vadd.f32 %v929, %v1016
        %v1018 = vpop.f32.mrf.mxu0
        %1019 = vmatprep.mubr.bf16.mxu0 0
        %1020 = vmatmul.mubr.bf16.gmra.mxu0 %v893
        %v1021 = vpop.f32.mrf.mxu0
        %v1022 = vadd.f32 %v929, %v1021
        %v1023 = vpop.f32.mrf.mxu0
        %v1024 = vpop.f32.mrf.mxu0
        %v1025 = vadd.f32 %v929, %v1024
        %v1026 = vpop.f32.mrf.mxu0
        %1027 = vmatprep.mubr.bf16.mxu0 0
        %1028 = vmatmul.mubr.bf16.gmra.mxu0 %v894
        %v1029 = vpop.f32.mrf.mxu0
        %v1030 = vadd.f32 %v929, %v1029
        %v1031 = vpop.f32.mrf.mxu0
        %v1032 = vpop.f32.mrf.mxu0
        %v1033 = vadd.f32 %v929, %v1032
        %v1034 = vpop.f32.mrf.mxu0
        %1035 = vmatprep.mubr.bf16.mxu0 0
        %1036 = vmatmul.mubr.bf16.gmra.mxu0 %v895
        %v1037 = vpop.f32.mrf.mxu0
        %v1038 = vadd.f32 %v929, %v1037
        %v1039 = vpop.f32.mrf.mxu0
        %v1040 = vpop.f32.mrf.mxu0
        %v1041 = vadd.f32 %v929, %v1040
        %v1042 = vpop.f32.mrf.mxu0
        %1043 = vmatprep.mubr.bf16.mxu0 0
        %1044 = vmatmul.mubr.bf16.gmra.mxu0 %v896
        %v1045 = vpop.f32.mrf.mxu0
        %v1046 = vadd.f32 %v929, %v1045
        %v1047 = vpop.f32.mrf.mxu0
        %v1048 = vpop.f32.mrf.mxu0
        %v1049 = vadd.f32 %v929, %v1048
        %v1050 = vpop.f32.mrf.mxu0
        %1051 = vmatprep.mubr.bf16.mxu0 0
        %1052 = vmatmul.mubr.bf16.gmra.mxu0 %v897
        %v1053 = vpop.f32.mrf.mxu0
        %v1054 = vadd.f32 %v929, %v1053
        %v1055 = vpop.f32.mrf.mxu0
        %v1056 = vpop.f32.mrf.mxu0
        %v1057 = vadd.f32 %v929, %v1056
        %v1058 = vpop.f32.mrf.mxu0
        %1059 = vmatprep.mubr.bf16.mxu0 0
        %1060 = vmatmul.mubr.bf16.gmra.mxu0 %v898
        %v1061 = vpop.f32.mrf.mxu0
        %v1062 = vadd.f32 %v929, %v1061
        %v1063 = vpop.f32.mrf.mxu0
        %v1064 = vpop.f32.mrf.mxu0
        %v1065 = vadd.f32 %v929, %v1064
        %v1066 = vpop.f32.mrf.mxu0
        %1067 = vmatprep.mubr.bf16.mxu0 0
        %1068 = vmatmul.mubr.bf16.gmra.mxu0 %v899
        %v1069 = vpop.f32.mrf.mxu0
        %v1070 = vadd.f32 %v929, %v1069
        %v1071 = vpop.f32.mrf.mxu0
        %v1072 = vpop.f32.mrf.mxu0
        %v1073 = vadd.f32 %v929, %v1072
        %v1074 = vpop.f32.mrf.mxu0
        %1075 = vmatprep.mubr.bf16.mxu0 0
        %1076 = vmatmul.mubr.bf16.gmra.mxu0 %v900
        %v1077 = vpop.f32.mrf.mxu0
        %v1078 = vadd.f32 %v929, %v1077
        %v1079 = vpop.f32.mrf.mxu0
        %v1080 = vpop.f32.mrf.mxu0
        %v1081 = vadd.f32 %v929, %v1080
        %v1082 = vpop.f32.mrf.mxu0
        %1083 = vmatprep.mubr.bf16.mxu0 0
        %1084 = vmatmul.mubr.bf16.gmra.mxu0 %v901
        %v1085 = vpop.f32.mrf.mxu0
        %v1086 = vadd.f32 %v929, %v1085
        %v1087 = vpop.f32.mrf.mxu0
        %v1088 = vpop.f32.mrf.mxu0
        %v1089 = vadd.f32 %v929, %v1088
        %v1090 = vpop.f32.mrf.mxu0
        %1091 = vmatprep.mubr.bf16.mxu0 0
        %1092 = vmatmul.mubr.bf16.gmra.mxu0 %v902
        %v1093 = vpop.f32.mrf.mxu0
        %v1094 = vadd.f32 %v929, %v1093
        %v1095 = vpop.f32.mrf.mxu0
        %v1096 = vpop.f32.mrf.mxu0
        %v1097 = vadd.f32 %v929, %v1096
        %v1098 = vpop.f32.mrf.mxu0
        %1099 = vmatprep.mubr.bf16.mxu0 0
        %1100 = vmatmul.mubr.bf16.gmra.mxu0 %v903
        %v1101 = vpop.f32.mrf.mxu0
        %v1102 = vadd.f32 %v929, %v1101
        %v1103 = vpop.f32.mrf.mxu0
        %v1104 = vpop.f32.mrf.mxu0
        %v1105 = vadd.f32 %v929, %v1104
        %v1106 = vpop.f32.mrf.mxu0
        %1107 = vmatprep.mubr.bf16.mxu0 0
        %1108 = vmatmul.mubr.bf16.gmra.mxu0 %v904
        %v1109 = vpop.f32.mrf.mxu0
        %v1110 = vadd.f32 %v929, %v1109
        %v1111 = vpop.f32.mrf.mxu0
        %v1112 = vpop.f32.mrf.mxu0
        %v1113 = vadd.f32 %v929, %v1112
        %v1114 = vpop.f32.mrf.mxu0
        %1115 = vmatprep.mubr.bf16.mxu0 0
        %1116 = vmatmul.mubr.bf16.gmra.mxu0 %v905
        %v1117 = vpop.f32.mrf.mxu0
        %v1118 = vadd.f32 %v929, %v1117
        %v1119 = vpop.f32.mrf.mxu0
        %v1120 = vpop.f32.mrf.mxu0
        %v1121 = vadd.f32 %v929, %v1120
        %v1122 = vpop.f32.mrf.mxu0
        %1123 = vmatprep.mubr.bf16.mxu0 0
        %1124 = vmatmul.mubr.bf16.gmra.mxu0 %v906
        %v1125 = vpop.f32.mrf.mxu0
        %v1126 = vadd.f32 %v929, %v1125
        %v1127 = vpop.f32.mrf.mxu0
        %v1128 = vpop.f32.mrf.mxu0
        %v1129 = vadd.f32 %v929, %v1128
        %v1130 = vpop.f32.mrf.mxu0
        %1131 = vmatprep.mubr.bf16.mxu0 0
        %1132 = vmatmul.mubr.bf16.gmra.mxu0 %v907
        %v1133 = vpop.f32.mrf.mxu0
        %v1134 = vadd.f32 %v929, %v1133
        %v1135 = vpop.f32.mrf.mxu0
        %v1136 = vpop.f32.mrf.mxu0
        %v1137 = vadd.f32 %v929, %v1136
        %v1138 = vpop.f32.mrf.mxu0
        %1139 = vdwg.mxu0
        %v1140 = vmax.f32 %v1014, 0.0
        %v1141 = vmax.f32 %v1017, 0.0
        %v1142 = vmax.f32 %v1022, 0.0
        %v1143 = vmax.f32 %v1025, 0.0
        %v1144 = vmax.f32 %v1030, 0.0
        %v1145 = vmax.f32 %v1033, 0.0
        %v1146 = vmax.f32 %v1038, 0.0
        %v1147 = vmax.f32 %v1041, 0.0
        %v1148 = vmax.f32 %v1046, 0.0
        %v1149 = vmax.f32 %v1049, 0.0
        %v1150 = vmax.f32 %v1054, 0.0
        %v1151 = vmax.f32 %v1057, 0.0
        %v1152 = vmax.f32 %v1062, 0.0
        %v1153 = vmax.f32 %v1065, 0.0
        %v1154 = vmax.f32 %v1070, 0.0
        %v1155 = vmax.f32 %v1073, 0.0
        %v1156 = vmax.f32 %v1078, 0.0
        %v1157 = vmax.f32 %v1081, 0.0
        %v1158 = vmax.f32 %v1086, 0.0
        %v1159 = vmax.f32 %v1089, 0.0
        %v1160 = vmax.f32 %v1094, 0.0
        %v1161 = vmax.f32 %v1097, 0.0
        %v1162 = vmax.f32 %v1102, 0.0
        %v1163 = vmax.f32 %v1105, 0.0
        %v1164 = vmax.f32 %v1110, 0.0
        %v1165 = vmax.f32 %v1113, 0.0
        %v1166 = vmax.f32 %v1118, 0.0
        %v1167 = vmax.f32 %v1121, 0.0
        %v1168 = vmax.f32 %v1126, 0.0
        %v1169 = vmax.f32 %v1129, 0.0
        %v1170 = vmax.f32 %v1134, 0.0
        %v1171 = vmax.f32 %v1137, 0.0
        %v1172 = vpack.c.bf16 %v1141, %v1140
        %v1173 = vpack.c.bf16 %v1143, %v1142
        %v1174 = vpack.c.bf16 %v1145, %v1144
        %v1175 = vpack.c.bf16 %v1147, %v1146
        %v1176 = vpack.c.bf16 %v1149, %v1148
        %v1177 = vpack.c.bf16 %v1151, %v1150
        %v1178 = vpack.c.bf16 %v1153, %v1152
        %v1179 = vpack.c.bf16 %v1155, %v1154
        %v1180 = vpack.c.bf16 %v1157, %v1156
        %v1181 = vpack.c.bf16 %v1159, %v1158
        %v1182 = vpack.c.bf16 %v1161, %v1160
        %v1183 = vpack.c.bf16 %v1163, %v1162
        %v1184 = vpack.c.bf16 %v1165, %v1164
        %v1185 = vpack.c.bf16 %v1167, %v1166
        %v1186 = vpack.c.bf16 %v1169, %v1168
        %v1187 = vpack.c.bf16 %v1171, %v1170
        %v1188 = vld [vmem:[#allocation10] sm:$0xff]
        %v1189 = vld [vmem:[#allocation10 + $0x8] sm:$0xff]
        %v1190 = vld [vmem:[#allocation10 + $0x10] sm:$0xff]
        %v1191 = vld [vmem:[#allocation10 + $0x18] sm:$0xff]
        %v1192 = vld [vmem:[#allocation10 + $0x20] sm:$0xff]
        %v1193 = vld [vmem:[#allocation10 + $0x28] sm:$0xff]
        %v1194 = vld [vmem:[#allocation10 + $0x30] sm:$0xff]
        %v1195 = vld [vmem:[#allocation10 + $0x38] sm:$0xff]
        %v1196 = vld [vmem:[#allocation10 + $0x40] sm:$0xff]
        %v1197 = vld [vmem:[#allocation10 + $0x48] sm:$0xff]
        %v1198 = vld [vmem:[#allocation10 + $0x50] sm:$0xff]
        %v1199 = vld [vmem:[#allocation10 + $0x58] sm:$0xff]
        %v1200 = vld [vmem:[#allocation10 + $0x60] sm:$0xff]
        %v1201 = vld [vmem:[#allocation10 + $0x68] sm:$0xff]
        %v1202 = vld [vmem:[#allocation10 + $0x70] sm:$0xff]
        %v1203 = vld [vmem:[#allocation10 + $0x78] sm:$0xff]
        %v1204 = vld [vmem:[%s6] sm:$0x3]
        %v1206 = vlaneseq
        %v1207 = vshrl.u32 %v1206, 7
        %v1208 = vsub.s32 0, %v1207
        %v1209 = vrot.slane %v1204, %v1208
        %v1210 = vlaneseq
        %v1211 = vshrl.u32 %v1210, 7
        %v1212 = vsub.s32 1, %v1211
        %v1213 = vrot.slane %v1204, %v1212
        %v1232 = vunpack.c.l.b16 %v1188
        %v1233 = vunpack.c.h.b16 %v1188
        %v1234 = vunpack.c.l.b16 %v1189
        %v1235 = vunpack.c.h.b16 %v1189
        %v1236 = vunpack.c.l.b16 %v1190
        %v1237 = vunpack.c.h.b16 %v1190
        %v1238 = vunpack.c.l.b16 %v1191
        %v1239 = vunpack.c.h.b16 %v1191
        %v1240 = vunpack.c.l.b16 %v1192
        %v1241 = vunpack.c.h.b16 %v1192
        %v1242 = vunpack.c.l.b16 %v1193
        %v1243 = vunpack.c.h.b16 %v1193
        %v1244 = vunpack.c.l.b16 %v1194
        %v1245 = vunpack.c.h.b16 %v1194
        %v1246 = vunpack.c.l.b16 %v1195
        %v1247 = vunpack.c.h.b16 %v1195
        %v1248 = vunpack.c.l.b16 %v1196
        %v1249 = vunpack.c.h.b16 %v1196
        %v1250 = vunpack.c.l.b16 %v1197
        %v1251 = vunpack.c.h.b16 %v1197
        %v1252 = vunpack.c.l.b16 %v1198
        %v1253 = vunpack.c.h.b16 %v1198
        %v1254 = vunpack.c.l.b16 %v1199
        %v1255 = vunpack.c.h.b16 %v1199
        %v1256 = vunpack.c.l.b16 %v1200
        %v1257 = vunpack.c.h.b16 %v1200
        %v1258 = vunpack.c.l.b16 %v1201
        %v1259 = vunpack.c.h.b16 %v1201
        %v1260 = vunpack.c.l.b16 %v1202
        %v1261 = vunpack.c.h.b16 %v1202
        %v1262 = vunpack.c.l.b16 %v1203
        %v1263 = vunpack.c.h.b16 %v1203
        %v1264 = vpack.c.b16 %v1234, %v1232
        %v1265 = vpack.c.b16 %v1235, %v1233
        %v1266 = vpack.c.b16 %v1238, %v1236
        %v1267 = vpack.c.b16 %v1239, %v1237
        %v1268 = vpack.c.b16 %v1242, %v1240
        %v1269 = vpack.c.b16 %v1243, %v1241
        %v1270 = vpack.c.b16 %v1246, %v1244
        %v1271 = vpack.c.b16 %v1247, %v1245
        %v1272 = vpack.c.b16 %v1250, %v1248
        %v1273 = vpack.c.b16 %v1251, %v1249
        %v1274 = vpack.c.b16 %v1254, %v1252
        %v1275 = vpack.c.b16 %v1255, %v1253
        %v1276 = vpack.c.b16 %v1258, %v1256
        %v1277 = vpack.c.b16 %v1259, %v1257
        %v1278 = vpack.c.b16 %v1262, %v1260
        %v1279 = vpack.c.b16 %v1263, %v1261
        %1296 = vmatprep.subr.bf16.mxu0 %v1279
        %1297 = vmatpush1.bf16.msra.mxu0 %v1278
        %1298 = vmatprep.subr.bf16.mxu0 %v1277
        %1299 = vmatpush1.bf16.msra.mxu0 %v1276
        %1300 = vmatprep.subr.bf16.mxu0 %v1275
        %1301 = vmatpush1.bf16.msra.mxu0 %v1274
        %1302 = vmatprep.subr.bf16.mxu0 %v1273
        %1303 = vmatpush1.bf16.msra.mxu0 %v1272
        %1304 = vmatprep.subr.bf16.mxu0 %v1271
        %1305 = vmatpush1.bf16.msra.mxu0 %v1270
        %1306 = vmatprep.subr.bf16.mxu0 %v1269
        %1307 = vmatpush1.bf16.msra.mxu0 %v1268
        %1308 = vmatprep.subr.bf16.mxu0 %v1267
        %1309 = vmatpush1.bf16.msra.mxu0 %v1266
        %1310 = vmatprep.subr.bf16.mxu0 %v1265
        %1311 = vmatpush1.bf16.msra.mxu0 %v1264
        %1312 = vmatprep.subr.bf16.mxu0 0
        %1313 = vmatpush2.bf16.msra.mxu0 0
        %1314 = vmatprep.subr.bf16.mxu0 0
        %1315 = vmatpush2.bf16.msra.mxu0 0
        %1316 = vmatprep.subr.bf16.mxu0 0
        %1317 = vmatpush2.bf16.msra.mxu0 0
        %1318 = vmatprep.subr.bf16.mxu0 0
        %1319 = vmatpush2.bf16.msra.mxu0 0
        %1320 = vmatprep.subr.bf16.mxu0 0
        %1321 = vmatpush2.bf16.msra.mxu0 0
        %1322 = vmatprep.subr.bf16.mxu0 0
        %1323 = vmatpush2.bf16.msra.mxu0 0
        %1324 = vmatprep.subr.bf16.mxu0 0
        %1325 = vmatpush2.bf16.msra.mxu0 0
        %1326 = vmatprep.subr.bf16.mxu0 0
        %1327 = vmatpush2.bf16.msra.mxu0 0
        %1328 = vmatprep.mubr.bf16.mxu0 0
        %1329 = vmatmul.mubr.bf16.gmra.mxu0 %v1172
        %v1330 = vpop.f32.mrf.mxu0
        %v1331 = vadd.f32 %v1209, %v1330
        %v1332 = vpop.f32.mrf.mxu0
        %v1333 = vadd.f32 %v1213, %v1332
        %v1334 = vpop.f32.mrf.mxu0
        %v1335 = vadd.f32 %v1209, %v1334
        %v1336 = vpop.f32.mrf.mxu0
        %v1337 = vadd.f32 %v1213, %v1336
        %1338 = vmatprep.mubr.bf16.mxu0 0
        %1339 = vmatmul.mubr.bf16.gmra.mxu0 %v1173
        %v1340 = vpop.f32.mrf.mxu0
        %v1341 = vadd.f32 %v1209, %v1340
        %v1342 = vpop.f32.mrf.mxu0
        %v1343 = vadd.f32 %v1213, %v1342
        %v1344 = vpop.f32.mrf.mxu0
        %v1345 = vadd.f32 %v1209, %v1344
        %v1346 = vpop.f32.mrf.mxu0
        %v1347 = vadd.f32 %v1213, %v1346
        %1348 = vmatprep.mubr.bf16.mxu0 0
        %1349 = vmatmul.mubr.bf16.gmra.mxu0 %v1174
        %v1350 = vpop.f32.mrf.mxu0
        %v1351 = vadd.f32 %v1209, %v1350
        %v1352 = vpop.f32.mrf.mxu0
        %v1353 = vadd.f32 %v1213, %v1352
        %v1354 = vpop.f32.mrf.mxu0
        %v1355 = vadd.f32 %v1209, %v1354
        %v1356 = vpop.f32.mrf.mxu0
        %v1357 = vadd.f32 %v1213, %v1356
        %1358 = vmatprep.mubr.bf16.mxu0 0
        %1359 = vmatmul.mubr.bf16.gmra.mxu0 %v1175
        %v1360 = vpop.f32.mrf.mxu0
        %v1361 = vadd.f32 %v1209, %v1360
        %v1362 = vpop.f32.mrf.mxu0
        %v1363 = vadd.f32 %v1213, %v1362
        %v1364 = vpop.f32.mrf.mxu0
        %v1365 = vadd.f32 %v1209, %v1364
        %v1366 = vpop.f32.mrf.mxu0
        %v1367 = vadd.f32 %v1213, %v1366
        %1368 = vmatprep.mubr.bf16.mxu0 0
        %1369 = vmatmul.mubr.bf16.gmra.mxu0 %v1176
        %v1370 = vpop.f32.mrf.mxu0
        %v1371 = vadd.f32 %v1209, %v1370
        %v1372 = vpop.f32.mrf.mxu0
        %v1373 = vadd.f32 %v1213, %v1372
        %v1374 = vpop.f32.mrf.mxu0
        %v1375 = vadd.f32 %v1209, %v1374
        %v1376 = vpop.f32.mrf.mxu0
        %v1377 = vadd.f32 %v1213, %v1376
        %1378 = vmatprep.mubr.bf16.mxu0 0
        %1379 = vmatmul.mubr.bf16.gmra.mxu0 %v1177
        %v1380 = vpop.f32.mrf.mxu0
        %v1381 = vadd.f32 %v1209, %v1380
        %v1382 = vpop.f32.mrf.mxu0
        %v1383 = vadd.f32 %v1213, %v1382
        %v1384 = vpop.f32.mrf.mxu0
        %v1385 = vadd.f32 %v1209, %v1384
        %v1386 = vpop.f32.mrf.mxu0
        %v1387 = vadd.f32 %v1213, %v1386
        %1388 = vmatprep.mubr.bf16.mxu0 0
        %1389 = vmatmul.mubr.bf16.gmra.mxu0 %v1178
        %v1390 = vpop.f32.mrf.mxu0
        %v1391 = vadd.f32 %v1209, %v1390
        %v1392 = vpop.f32.mrf.mxu0
        %v1393 = vadd.f32 %v1213, %v1392
        %v1394 = vpop.f32.mrf.mxu0
        %v1395 = vadd.f32 %v1209, %v1394
        %v1396 = vpop.f32.mrf.mxu0
        %v1397 = vadd.f32 %v1213, %v1396
        %1398 = vmatprep.mubr.bf16.mxu0 0
        %1399 = vmatmul.mubr.bf16.gmra.mxu0 %v1179
        %v1400 = vpop.f32.mrf.mxu0
        %v1401 = vadd.f32 %v1209, %v1400
        %v1402 = vpop.f32.mrf.mxu0
        %v1403 = vadd.f32 %v1213, %v1402
        %v1404 = vpop.f32.mrf.mxu0
        %v1405 = vadd.f32 %v1209, %v1404
        %v1406 = vpop.f32.mrf.mxu0
        %v1407 = vadd.f32 %v1213, %v1406
        %1408 = vmatprep.mubr.bf16.mxu0 0
        %1409 = vmatmul.mubr.bf16.gmra.mxu0 %v1180
        %v1410 = vpop.f32.mrf.mxu0
        %v1411 = vadd.f32 %v1209, %v1410
        %v1412 = vpop.f32.mrf.mxu0
        %v1413 = vadd.f32 %v1213, %v1412
        %v1414 = vpop.f32.mrf.mxu0
        %v1415 = vadd.f32 %v1209, %v1414
        %v1416 = vpop.f32.mrf.mxu0
        %v1417 = vadd.f32 %v1213, %v1416
        %1418 = vmatprep.mubr.bf16.mxu0 0
        %1419 = vmatmul.mubr.bf16.gmra.mxu0 %v1181
        %v1420 = vpop.f32.mrf.mxu0
        %v1421 = vadd.f32 %v1209, %v1420
        %v1422 = vpop.f32.mrf.mxu0
        %v1423 = vadd.f32 %v1213, %v1422
        %v1424 = vpop.f32.mrf.mxu0
        %v1425 = vadd.f32 %v1209, %v1424
        %v1426 = vpop.f32.mrf.mxu0
        %v1427 = vadd.f32 %v1213, %v1426
        %1428 = vmatprep.mubr.bf16.mxu0 0
        %1429 = vmatmul.mubr.bf16.gmra.mxu0 %v1182
        %v1430 = vpop.f32.mrf.mxu0
        %v1431 = vadd.f32 %v1209, %v1430
        %v1432 = vpop.f32.mrf.mxu0
        %v1433 = vadd.f32 %v1213, %v1432
        %v1434 = vpop.f32.mrf.mxu0
        %v1435 = vadd.f32 %v1209, %v1434
        %v1436 = vpop.f32.mrf.mxu0
        %v1437 = vadd.f32 %v1213, %v1436
        %1438 = vmatprep.mubr.bf16.mxu0 0
        %1439 = vmatmul.mubr.bf16.gmra.mxu0 %v1183
        %v1440 = vpop.f32.mrf.mxu0
        %v1441 = vadd.f32 %v1209, %v1440
        %v1442 = vpop.f32.mrf.mxu0
        %v1443 = vadd.f32 %v1213, %v1442
        %v1444 = vpop.f32.mrf.mxu0
        %v1445 = vadd.f32 %v1209, %v1444
        %v1446 = vpop.f32.mrf.mxu0
        %v1447 = vadd.f32 %v1213, %v1446
        %1448 = vmatprep.mubr.bf16.mxu0 0
        %1449 = vmatmul.mubr.bf16.gmra.mxu0 %v1184
        %v1450 = vpop.f32.mrf.mxu0
        %v1451 = vadd.f32 %v1209, %v1450
        %v1452 = vpop.f32.mrf.mxu0
        %v1453 = vadd.f32 %v1213, %v1452
        %v1454 = vpop.f32.mrf.mxu0
        %v1455 = vadd.f32 %v1209, %v1454
        %v1456 = vpop.f32.mrf.mxu0
        %v1457 = vadd.f32 %v1213, %v1456
        %1458 = vmatprep.mubr.bf16.mxu0 0
        %1459 = vmatmul.mubr.bf16.gmra.mxu0 %v1185
        %v1460 = vpop.f32.mrf.mxu0
        %v1461 = vadd.f32 %v1209, %v1460
        %v1462 = vpop.f32.mrf.mxu0
        %v1463 = vadd.f32 %v1213, %v1462
        %v1464 = vpop.f32.mrf.mxu0
        %v1465 = vadd.f32 %v1209, %v1464
        %v1466 = vpop.f32.mrf.mxu0
        %v1467 = vadd.f32 %v1213, %v1466
        %1468 = vmatprep.mubr.bf16.mxu0 0
        %1469 = vmatmul.mubr.bf16.gmra.mxu0 %v1186
        %v1470 = vpop.f32.mrf.mxu0
        %v1471 = vadd.f32 %v1209, %v1470
        %v1472 = vpop.f32.mrf.mxu0
        %v1473 = vadd.f32 %v1213, %v1472
        %v1474 = vpop.f32.mrf.mxu0
        %v1475 = vadd.f32 %v1209, %v1474
        %v1476 = vpop.f32.mrf.mxu0
        %v1477 = vadd.f32 %v1213, %v1476
        %1478 = vmatprep.mubr.bf16.mxu0 0
        %1479 = vmatmul.mubr.bf16.gmra.mxu0 %v1187
        %v1480 = vpop.f32.mrf.mxu0
        %v1481 = vadd.f32 %v1209, %v1480
        %v1482 = vpop.f32.mrf.mxu0
        %v1483 = vadd.f32 %v1213, %v1482
        %v1484 = vpop.f32.mrf.mxu0
        %v1485 = vadd.f32 %v1209, %v1484
        %v1486 = vpop.f32.mrf.mxu0
        %v1487 = vadd.f32 %v1213, %v1486
        %1488 = vdwg.mxu0
        %v1489 = vmax.f32 %v1331, 0.0
        %v1490 = vmax.f32 %v1333, 0.0
        %v1491 = vmax.f32 %v1335, 0.0
        %v1492 = vmax.f32 %v1337, 0.0
        %v1493 = vmax.f32 %v1341, 0.0
        %v1494 = vmax.f32 %v1343, 0.0
        %v1495 = vmax.f32 %v1345, 0.0
        %v1496 = vmax.f32 %v1347, 0.0
        %v1497 = vmax.f32 %v1351, 0.0
        %v1498 = vmax.f32 %v1353, 0.0
        %v1499 = vmax.f32 %v1355, 0.0
        %v1500 = vmax.f32 %v1357, 0.0
        %v1501 = vmax.f32 %v1361, 0.0
        %v1502 = vmax.f32 %v1363, 0.0
        %v1503 = vmax.f32 %v1365, 0.0
        %v1504 = vmax.f32 %v1367, 0.0
        %v1505 = vmax.f32 %v1371, 0.0
        %v1506 = vmax.f32 %v1373, 0.0
        %v1507 = vmax.f32 %v1375, 0.0
        %v1508 = vmax.f32 %v1377, 0.0
        %v1509 = vmax.f32 %v1381, 0.0
        %v1510 = vmax.f32 %v1383, 0.0
        %v1511 = vmax.f32 %v1385, 0.0
        %v1512 = vmax.f32 %v1387, 0.0
        %v1513 = vmax.f32 %v1391, 0.0
        %v1514 = vmax.f32 %v1393, 0.0
        %v1515 = vmax.f32 %v1395, 0.0
        %v1516 = vmax.f32 %v1397, 0.0
        %v1517 = vmax.f32 %v1401, 0.0
        %v1518 = vmax.f32 %v1403, 0.0
        %v1519 = vmax.f32 %v1405, 0.0
        %v1520 = vmax.f32 %v1407, 0.0
        %v1521 = vmax.f32 %v1411, 0.0
        %v1522 = vmax.f32 %v1413, 0.0
        %v1523 = vmax.f32 %v1415, 0.0
        %v1524 = vmax.f32 %v1417, 0.0
        %v1525 = vmax.f32 %v1421, 0.0
        %v1526 = vmax.f32 %v1423, 0.0
        %v1527 = vmax.f32 %v1425, 0.0
        %v1528 = vmax.f32 %v1427, 0.0
        %v1529 = vmax.f32 %v1431, 0.0
        %v1530 = vmax.f32 %v1433, 0.0
        %v1531 = vmax.f32 %v1435, 0.0
        %v1532 = vmax.f32 %v1437, 0.0
        %v1533 = vmax.f32 %v1441, 0.0
        %v1534 = vmax.f32 %v1443, 0.0
        %v1535 = vmax.f32 %v1445, 0.0
        %v1536 = vmax.f32 %v1447, 0.0
        %v1537 = vmax.f32 %v1451, 0.0
        %v1538 = vmax.f32 %v1453, 0.0
        %v1539 = vmax.f32 %v1455, 0.0
        %v1540 = vmax.f32 %v1457, 0.0
        %v1541 = vmax.f32 %v1461, 0.0
        %v1542 = vmax.f32 %v1463, 0.0
        %v1543 = vmax.f32 %v1465, 0.0
        %v1544 = vmax.f32 %v1467, 0.0
        %v1545 = vmax.f32 %v1471, 0.0
        %v1546 = vmax.f32 %v1473, 0.0
        %v1547 = vmax.f32 %v1475, 0.0
        %v1548 = vmax.f32 %v1477, 0.0
        %v1549 = vmax.f32 %v1481, 0.0
        %v1550 = vmax.f32 %v1483, 0.0
        %v1551 = vmax.f32 %v1485, 0.0
        %v1552 = vmax.f32 %v1487, 0.0
        %v1553 = vpack.c.bf16 %v1491, %v1489
        %v1554 = vpack.c.bf16 %v1492, %v1490
        %v1555 = vpack.c.bf16 %v1495, %v1493
        %v1556 = vpack.c.bf16 %v1496, %v1494
        %v1557 = vpack.c.bf16 %v1499, %v1497
        %v1558 = vpack.c.bf16 %v1500, %v1498
        %v1559 = vpack.c.bf16 %v1503, %v1501
        %v1560 = vpack.c.bf16 %v1504, %v1502
        %v1561 = vpack.c.bf16 %v1507, %v1505
        %v1562 = vpack.c.bf16 %v1508, %v1506
        %v1563 = vpack.c.bf16 %v1511, %v1509
        %v1564 = vpack.c.bf16 %v1512, %v1510
        %v1565 = vpack.c.bf16 %v1515, %v1513
        %v1566 = vpack.c.bf16 %v1516, %v1514
        %v1567 = vpack.c.bf16 %v1519, %v1517
        %v1568 = vpack.c.bf16 %v1520, %v1518
        %v1569 = vpack.c.bf16 %v1523, %v1521
        %v1570 = vpack.c.bf16 %v1524, %v1522
        %v1571 = vpack.c.bf16 %v1527, %v1525
        %v1572 = vpack.c.bf16 %v1528, %v1526
        %v1573 = vpack.c.bf16 %v1531, %v1529
        %v1574 = vpack.c.bf16 %v1532, %v1530
        %v1575 = vpack.c.bf16 %v1535, %v1533
        %v1576 = vpack.c.bf16 %v1536, %v1534
        %v1577 = vpack.c.bf16 %v1539, %v1537
        %v1578 = vpack.c.bf16 %v1540, %v1538
        %v1579 = vpack.c.bf16 %v1543, %v1541
        %v1580 = vpack.c.bf16 %v1544, %v1542
        %v1581 = vpack.c.bf16 %v1547, %v1545
        %v1582 = vpack.c.bf16 %v1548, %v1546
        %v1583 = vpack.c.bf16 %v1551, %v1549
        %v1584 = vpack.c.bf16 %v1552, %v1550
        %v1585 = vld [vmem:[#allocation11] sm:$0xff]
        %v1586 = vld [vmem:[#allocation11 + $0x8] sm:$0xff]
        %v1587 = vld [vmem:[#allocation11 + $0x10] sm:$0xff]
        %v1588 = vld [vmem:[#allocation11 + $0x18] sm:$0xff]
        %v1589 = vld [vmem:[#allocation11 + $0x20] sm:$0xff]
        %v1590 = vld [vmem:[#allocation11 + $0x28] sm:$0xff]
        %v1591 = vld [vmem:[#allocation11 + $0x30] sm:$0xff]
        %v1592 = vld [vmem:[#allocation11 + $0x38] sm:$0xff]
        %v1593 = vld [vmem:[#allocation11 + $0x40] sm:$0xff]
        %v1594 = vld [vmem:[#allocation11 + $0x48] sm:$0xff]
        %v1595 = vld [vmem:[#allocation11 + $0x50] sm:$0xff]
        %v1596 = vld [vmem:[#allocation11 + $0x58] sm:$0xff]
        %v1597 = vld [vmem:[#allocation11 + $0x60] sm:$0xff]
        %v1598 = vld [vmem:[#allocation11 + $0x68] sm:$0xff]
        %v1599 = vld [vmem:[#allocation11 + $0x70] sm:$0xff]
        %v1600 = vld [vmem:[#allocation11 + $0x78] sm:$0xff]
        %v1601 = vld [vmem:[#allocation11 + $0x80] sm:$0xff]
        %v1602 = vld [vmem:[#allocation11 + $0x88] sm:$0xff]
        %v1603 = vld [vmem:[#allocation11 + $0x90] sm:$0xff]
        %v1604 = vld [vmem:[#allocation11 + $0x98] sm:$0xff]
        %v1605 = vld [vmem:[#allocation11 + $0xa0] sm:$0xff]
        %v1606 = vld [vmem:[#allocation11 + $0xa8] sm:$0xff]
        %v1607 = vld [vmem:[#allocation11 + $0xb0] sm:$0xff]
        %v1608 = vld [vmem:[#allocation11 + $0xb8] sm:$0xff]
        %v1609 = vld [vmem:[#allocation11 + $0xc0] sm:$0xff]
        %v1610 = vld [vmem:[#allocation11 + $0xc8] sm:$0xff]
        %v1611 = vld [vmem:[#allocation11 + $0xd0] sm:$0xff]
        %v1612 = vld [vmem:[#allocation11 + $0xd8] sm:$0xff]
        %v1613 = vld [vmem:[#allocation11 + $0xe0] sm:$0xff]
        %v1614 = vld [vmem:[#allocation11 + $0xe8] sm:$0xff]
        %v1615 = vld [vmem:[#allocation11 + $0xf0] sm:$0xff]
        %v1616 = vld [vmem:[#allocation11 + $0xf8] sm:$0xff]
        %v1617 = vld [vmem:[%s8] sm:$0x3]
        %v1619 = vlaneseq
        %v1620 = vshrl.u32 %v1619, 7
        %v1621 = vsub.s32 0, %v1620
        %v1622 = vrot.slane %v1617, %v1621
        %v1623 = vlaneseq
        %v1624 = vshrl.u32 %v1623, 7
        %v1625 = vsub.s32 1, %v1624
        %v1626 = vrot.slane %v1617, %v1625
        %v1661 = vunpack.c.l.b16 %v1585
        %v1662 = vunpack.c.h.b16 %v1585
        %v1663 = vunpack.c.l.b16 %v1586
        %v1664 = vunpack.c.h.b16 %v1586
        %v1665 = vunpack.c.l.b16 %v1587
        %v1666 = vunpack.c.h.b16 %v1587
        %v1667 = vunpack.c.l.b16 %v1588
        %v1668 = vunpack.c.h.b16 %v1588
        %v1669 = vunpack.c.l.b16 %v1589
        %v1670 = vunpack.c.h.b16 %v1589
        %v1671 = vunpack.c.l.b16 %v1590
        %v1672 = vunpack.c.h.b16 %v1590
        %v1673 = vunpack.c.l.b16 %v1591
        %v1674 = vunpack.c.h.b16 %v1591
        %v1675 = vunpack.c.l.b16 %v1592
        %v1676 = vunpack.c.h.b16 %v1592
        %v1677 = vunpack.c.l.b16 %v1593
        %v1678 = vunpack.c.h.b16 %v1593
        %v1679 = vunpack.c.l.b16 %v1594
        %v1680 = vunpack.c.h.b16 %v1594
        %v1681 = vunpack.c.l.b16 %v1595
        %v1682 = vunpack.c.h.b16 %v1595
        %v1683 = vunpack.c.l.b16 %v1596
        %v1684 = vunpack.c.h.b16 %v1596
        %v1685 = vunpack.c.l.b16 %v1597
        %v1686 = vunpack.c.h.b16 %v1597
        %v1687 = vunpack.c.l.b16 %v1598
        %v1688 = vunpack.c.h.b16 %v1598
        %v1689 = vunpack.c.l.b16 %v1599
        %v1690 = vunpack.c.h.b16 %v1599
        %v1691 = vunpack.c.l.b16 %v1600
        %v1692 = vunpack.c.h.b16 %v1600
        %v1693 = vunpack.c.l.b16 %v1601
        %v1694 = vunpack.c.h.b16 %v1601
        %v1695 = vunpack.c.l.b16 %v1602
        %v1696 = vunpack.c.h.b16 %v1602
        %v1697 = vunpack.c.l.b16 %v1603
        %v1698 = vunpack.c.h.b16 %v1603
        %v1699 = vunpack.c.l.b16 %v1604
        %v1700 = vunpack.c.h.b16 %v1604
        %v1701 = vunpack.c.l.b16 %v1605
        %v1702 = vunpack.c.h.b16 %v1605
        %v1703 = vunpack.c.l.b16 %v1606
        %v1704 = vunpack.c.h.b16 %v1606
        %v1705 = vunpack.c.l.b16 %v1607
        %v1706 = vunpack.c.h.b16 %v1607
        %v1707 = vunpack.c.l.b16 %v1608
        %v1708 = vunpack.c.h.b16 %v1608
        %v1709 = vunpack.c.l.b16 %v1609
        %v1710 = vunpack.c.h.b16 %v1609
        %v1711 = vunpack.c.l.b16 %v1610
        %v1712 = vunpack.c.h.b16 %v1610
        %v1713 = vunpack.c.l.b16 %v1611
        %v1714 = vunpack.c.h.b16 %v1611
        %v1715 = vunpack.c.l.b16 %v1612
        %v1716 = vunpack.c.h.b16 %v1612
        %v1717 = vunpack.c.l.b16 %v1613
        %v1718 = vunpack.c.h.b16 %v1613
        %v1719 = vunpack.c.l.b16 %v1614
        %v1720 = vunpack.c.h.b16 %v1614
        %v1721 = vunpack.c.l.b16 %v1615
        %v1722 = vunpack.c.h.b16 %v1615
        %v1723 = vunpack.c.l.b16 %v1616
        %v1724 = vunpack.c.h.b16 %v1616
        %v1725 = vpack.c.b16 %v1663, %v1661
        %v1726 = vpack.c.b16 %v1664, %v1662
        %v1727 = vpack.c.b16 %v1667, %v1665
        %v1728 = vpack.c.b16 %v1668, %v1666
        %v1729 = vpack.c.b16 %v1671, %v1669
        %v1730 = vpack.c.b16 %v1672, %v1670
        %v1731 = vpack.c.b16 %v1675, %v1673
        %v1732 = vpack.c.b16 %v1676, %v1674
        %v1733 = vpack.c.b16 %v1679, %v1677
        %v1734 = vpack.c.b16 %v1680, %v1678
        %v1735 = vpack.c.b16 %v1683, %v1681
        %v1736 = vpack.c.b16 %v1684, %v1682
        %v1737 = vpack.c.b16 %v1687, %v1685
        %v1738 = vpack.c.b16 %v1688, %v1686
        %v1739 = vpack.c.b16 %v1691, %v1689
        %v1740 = vpack.c.b16 %v1692, %v1690
        %v1741 = vpack.c.b16 %v1695, %v1693
        %v1742 = vpack.c.b16 %v1696, %v1694
        %v1743 = vpack.c.b16 %v1699, %v1697
        %v1744 = vpack.c.b16 %v1700, %v1698
        %v1745 = vpack.c.b16 %v1703, %v1701
        %v1746 = vpack.c.b16 %v1704, %v1702
        %v1747 = vpack.c.b16 %v1707, %v1705
        %v1748 = vpack.c.b16 %v1708, %v1706
        %v1749 = vpack.c.b16 %v1711, %v1709
        %v1750 = vpack.c.b16 %v1712, %v1710
        %v1751 = vpack.c.b16 %v1715, %v1713
        %v1752 = vpack.c.b16 %v1716, %v1714
        %v1753 = vpack.c.b16 %v1719, %v1717
        %v1754 = vpack.c.b16 %v1720, %v1718
        %v1755 = vpack.c.b16 %v1723, %v1721
        %v1756 = vpack.c.b16 %v1724, %v1722
        %1789 = vmatprep.subr.bf16.mxu0 %v1740
        %1790 = vmatpush1.bf16.msra.mxu0 %v1739
        %1791 = vmatprep.subr.bf16.mxu0 %v1738
        %1792 = vmatpush1.bf16.msra.mxu0 %v1737
        %1793 = vmatprep.subr.bf16.mxu0 %v1736
        %1794 = vmatpush1.bf16.msra.mxu0 %v1735
        %1795 = vmatprep.subr.bf16.mxu0 %v1734
        %1796 = vmatpush1.bf16.msra.mxu0 %v1733
        %1797 = vmatprep.subr.bf16.mxu0 %v1732
        %1798 = vmatpush1.bf16.msra.mxu0 %v1731
        %1799 = vmatprep.subr.bf16.mxu0 %v1730
        %1800 = vmatpush1.bf16.msra.mxu0 %v1729
        %1801 = vmatprep.subr.bf16.mxu0 %v1728
        %1802 = vmatpush1.bf16.msra.mxu0 %v1727
        %1803 = vmatprep.subr.bf16.mxu0 %v1726
        %1804 = vmatpush1.bf16.msra.mxu0 %v1725
        %1805 = vmatprep.subr.bf16.mxu0 %v1756
        %1806 = vmatpush2.bf16.msra.mxu0 %v1755
        %1807 = vmatprep.subr.bf16.mxu0 %v1754
        %1808 = vmatpush2.bf16.msra.mxu0 %v1753
        %1809 = vmatprep.subr.bf16.mxu0 %v1752
        %1810 = vmatpush2.bf16.msra.mxu0 %v1751
        %1811 = vmatprep.subr.bf16.mxu0 %v1750
        %1812 = vmatpush2.bf16.msra.mxu0 %v1749
        %1813 = vmatprep.subr.bf16.mxu0 %v1748
        %1814 = vmatpush2.bf16.msra.mxu0 %v1747
        %1815 = vmatprep.subr.bf16.mxu0 %v1746
        %1816 = vmatpush2.bf16.msra.mxu0 %v1745
        %1817 = vmatprep.subr.bf16.mxu0 %v1744
        %1818 = vmatpush2.bf16.msra.mxu0 %v1743
        %1819 = vmatprep.subr.bf16.mxu0 %v1742
        %1820 = vmatpush2.bf16.msra.mxu0 %v1741
        %1821 = vmatprep.mubr.bf16.mxu0 %v1554
        %1822 = vmatmul.mubr.bf16.gmra.mxu0 %v1553
        %v1823 = vpop.f32.mrf.mxu0
        %v1824 = vadd.f32 %v1622, %v1823
        %v1825 = vpop.f32.mrf.mxu0
        %v1826 = vadd.f32 %v1626, %v1825
        %v1827 = vpop.f32.mrf.mxu0
        %v1828 = vadd.f32 %v1622, %v1827
        %v1829 = vpop.f32.mrf.mxu0
        %v1830 = vadd.f32 %v1626, %v1829
        %1831 = vmatprep.mubr.bf16.mxu0 %v1556
        %1832 = vmatmul.mubr.bf16.gmra.mxu0 %v1555
        %v1833 = vpop.f32.mrf.mxu0
        %v1834 = vadd.f32 %v1622, %v1833
        %v1835 = vpop.f32.mrf.mxu0
        %v1836 = vadd.f32 %v1626, %v1835
        %v1837 = vpop.f32.mrf.mxu0
        %v1838 = vadd.f32 %v1622, %v1837
        %v1839 = vpop.f32.mrf.mxu0
        %v1840 = vadd.f32 %v1626, %v1839
        %1841 = vmatprep.mubr.bf16.mxu0 %v1558
        %1842 = vmatmul.mubr.bf16.gmra.mxu0 %v1557
        %v1843 = vpop.f32.mrf.mxu0
        %v1844 = vadd.f32 %v1622, %v1843
        %v1845 = vpop.f32.mrf.mxu0
        %v1846 = vadd.f32 %v1626, %v1845
        %v1847 = vpop.f32.mrf.mxu0
        %v1848 = vadd.f32 %v1622, %v1847
        %v1849 = vpop.f32.mrf.mxu0
        %v1850 = vadd.f32 %v1626, %v1849
        %1851 = vmatprep.mubr.bf16.mxu0 %v1560
        %1852 = vmatmul.mubr.bf16.gmra.mxu0 %v1559
        %v1853 = vpop.f32.mrf.mxu0
        %v1854 = vadd.f32 %v1622, %v1853
        %v1855 = vpop.f32.mrf.mxu0
        %v1856 = vadd.f32 %v1626, %v1855
        %v1857 = vpop.f32.mrf.mxu0
        %v1858 = vadd.f32 %v1622, %v1857
        %v1859 = vpop.f32.mrf.mxu0
        %v1860 = vadd.f32 %v1626, %v1859
        %1861 = vmatprep.mubr.bf16.mxu0 %v1562
        %1862 = vmatmul.mubr.bf16.gmra.mxu0 %v1561
        %v1863 = vpop.f32.mrf.mxu0
        %v1864 = vadd.f32 %v1622, %v1863
        %v1865 = vpop.f32.mrf.mxu0
        %v1866 = vadd.f32 %v1626, %v1865
        %v1867 = vpop.f32.mrf.mxu0
        %v1868 = vadd.f32 %v1622, %v1867
        %v1869 = vpop.f32.mrf.mxu0
        %v1870 = vadd.f32 %v1626, %v1869
        %1871 = vmatprep.mubr.bf16.mxu0 %v1564
        %1872 = vmatmul.mubr.bf16.gmra.mxu0 %v1563
        %v1873 = vpop.f32.mrf.mxu0
        %v1874 = vadd.f32 %v1622, %v1873
        %v1875 = vpop.f32.mrf.mxu0
        %v1876 = vadd.f32 %v1626, %v1875
        %v1877 = vpop.f32.mrf.mxu0
        %v1878 = vadd.f32 %v1622, %v1877
        %v1879 = vpop.f32.mrf.mxu0
        %v1880 = vadd.f32 %v1626, %v1879
        %1881 = vmatprep.mubr.bf16.mxu0 %v1566
        %1882 = vmatmul.mubr.bf16.gmra.mxu0 %v1565
        %v1883 = vpop.f32.mrf.mxu0
        %v1884 = vadd.f32 %v1622, %v1883
        %v1885 = vpop.f32.mrf.mxu0
        %v1886 = vadd.f32 %v1626, %v1885
        %v1887 = vpop.f32.mrf.mxu0
        %v1888 = vadd.f32 %v1622, %v1887
        %v1889 = vpop.f32.mrf.mxu0
        %v1890 = vadd.f32 %v1626, %v1889
        %1891 = vmatprep.mubr.bf16.mxu0 %v1568
        %1892 = vmatmul.mubr.bf16.gmra.mxu0 %v1567
        %v1893 = vpop.f32.mrf.mxu0
        %v1894 = vadd.f32 %v1622, %v1893
        %v1895 = vpop.f32.mrf.mxu0
        %v1896 = vadd.f32 %v1626, %v1895
        %v1897 = vpop.f32.mrf.mxu0
        %v1898 = vadd.f32 %v1622, %v1897
        %v1899 = vpop.f32.mrf.mxu0
        %v1900 = vadd.f32 %v1626, %v1899
        %1901 = vmatprep.mubr.bf16.mxu0 %v1570
        %1902 = vmatmul.mubr.bf16.gmra.mxu0 %v1569
        %v1903 = vpop.f32.mrf.mxu0
        %v1904 = vadd.f32 %v1622, %v1903
        %v1905 = vpop.f32.mrf.mxu0
        %v1906 = vadd.f32 %v1626, %v1905
        %v1907 = vpop.f32.mrf.mxu0
        %v1908 = vadd.f32 %v1622, %v1907
        %v1909 = vpop.f32.mrf.mxu0
        %v1910 = vadd.f32 %v1626, %v1909
        %1911 = vmatprep.mubr.bf16.mxu0 %v1572
        %1912 = vmatmul.mubr.bf16.gmra.mxu0 %v1571
        %v1913 = vpop.f32.mrf.mxu0
        %v1914 = vadd.f32 %v1622, %v1913
        %v1915 = vpop.f32.mrf.mxu0
        %v1916 = vadd.f32 %v1626, %v1915
        %v1917 = vpop.f32.mrf.mxu0
        %v1918 = vadd.f32 %v1622, %v1917
        %v1919 = vpop.f32.mrf.mxu0
        %v1920 = vadd.f32 %v1626, %v1919
        %1921 = vmatprep.mubr.bf16.mxu0 %v1574
        %1922 = vmatmul.mubr.bf16.gmra.mxu0 %v1573
        %v1923 = vpop.f32.mrf.mxu0
        %v1924 = vadd.f32 %v1622, %v1923
        %v1925 = vpop.f32.mrf.mxu0
        %v1926 = vadd.f32 %v1626, %v1925
        %v1927 = vpop.f32.mrf.mxu0
        %v1928 = vadd.f32 %v1622, %v1927
        %v1929 = vpop.f32.mrf.mxu0
        %v1930 = vadd.f32 %v1626, %v1929
        %1931 = vmatprep.mubr.bf16.mxu0 %v1576
        %1932 = vmatmul.mubr.bf16.gmra.mxu0 %v1575
        %v1933 = vpop.f32.mrf.mxu0
        %v1934 = vadd.f32 %v1622, %v1933
        %v1935 = vpop.f32.mrf.mxu0
        %v1936 = vadd.f32 %v1626, %v1935
        %v1937 = vpop.f32.mrf.mxu0
        %v1938 = vadd.f32 %v1622, %v1937
        %v1939 = vpop.f32.mrf.mxu0
        %v1940 = vadd.f32 %v1626, %v1939
        %1941 = vmatprep.mubr.bf16.mxu0 %v1578
        %1942 = vmatmul.mubr.bf16.gmra.mxu0 %v1577
        %v1943 = vpop.f32.mrf.mxu0
        %v1944 = vadd.f32 %v1622, %v1943
        %v1945 = vpop.f32.mrf.mxu0
        %v1946 = vadd.f32 %v1626, %v1945
        %v1947 = vpop.f32.mrf.mxu0
        %v1948 = vadd.f32 %v1622, %v1947
        %v1949 = vpop.f32.mrf.mxu0
        %v1950 = vadd.f32 %v1626, %v1949
        %1951 = vmatprep.mubr.bf16.mxu0 %v1580
        %1952 = vmatmul.mubr.bf16.gmra.mxu0 %v1579
        %v1953 = vpop.f32.mrf.mxu0
        %v1954 = vadd.f32 %v1622, %v1953
        %v1955 = vpop.f32.mrf.mxu0
        %v1956 = vadd.f32 %v1626, %v1955
        %v1957 = vpop.f32.mrf.mxu0
        %v1958 = vadd.f32 %v1622, %v1957
        %v1959 = vpop.f32.mrf.mxu0
        %v1960 = vadd.f32 %v1626, %v1959
        %1961 = vmatprep.mubr.bf16.mxu0 %v1582
        %1962 = vmatmul.mubr.bf16.gmra.mxu0 %v1581
        %v1963 = vpop.f32.mrf.mxu0
        %v1964 = vadd.f32 %v1622, %v1963
        %v1965 = vpop.f32.mrf.mxu0
        %v1966 = vadd.f32 %v1626, %v1965
        %v1967 = vpop.f32.mrf.mxu0
        %v1968 = vadd.f32 %v1622, %v1967
        %v1969 = vpop.f32.mrf.mxu0
        %v1970 = vadd.f32 %v1626, %v1969
        %1971 = vmatprep.mubr.bf16.mxu0 %v1584
        %1972 = vmatmul.mubr.bf16.gmra.mxu0 %v1583
        %v1973 = vpop.f32.mrf.mxu0
        %v1974 = vadd.f32 %v1622, %v1973
        %v1975 = vpop.f32.mrf.mxu0
        %v1976 = vadd.f32 %v1626, %v1975
        %v1977 = vpop.f32.mrf.mxu0
        %v1978 = vadd.f32 %v1622, %v1977
        %v1979 = vpop.f32.mrf.mxu0
        %v1980 = vadd.f32 %v1626, %v1979
        %1981 = vdwg.mxu0
        %v1982 = vmax.f32 %v1824, 0.0
        %v1983 = vmax.f32 %v1826, 0.0
        %v1984 = vmax.f32 %v1828, 0.0
        %v1985 = vmax.f32 %v1830, 0.0
        %v1986 = vmax.f32 %v1834, 0.0
        %v1987 = vmax.f32 %v1836, 0.0
        %v1988 = vmax.f32 %v1838, 0.0
        %v1989 = vmax.f32 %v1840, 0.0
        %v1990 = vmax.f32 %v1844, 0.0
        %v1991 = vmax.f32 %v1846, 0.0
        %v1992 = vmax.f32 %v1848, 0.0
        %v1993 = vmax.f32 %v1850, 0.0
        %v1994 = vmax.f32 %v1854, 0.0
        %v1995 = vmax.f32 %v1856, 0.0
        %v1996 = vmax.f32 %v1858, 0.0
        %v1997 = vmax.f32 %v1860, 0.0
        %v1998 = vmax.f32 %v1864, 0.0
        %v1999 = vmax.f32 %v1866, 0.0
        %v2000 = vmax.f32 %v1868, 0.0
        %v2001 = vmax.f32 %v1870, 0.0
        %v2002 = vmax.f32 %v1874, 0.0
        %v2003 = vmax.f32 %v1876, 0.0
        %v2004 = vmax.f32 %v1878, 0.0
        %v2005 = vmax.f32 %v1880, 0.0
        %v2006 = vmax.f32 %v1884, 0.0
        %v2007 = vmax.f32 %v1886, 0.0
        %v2008 = vmax.f32 %v1888, 0.0
        %v2009 = vmax.f32 %v1890, 0.0
        %v2010 = vmax.f32 %v1894, 0.0
        %v2011 = vmax.f32 %v1896, 0.0
        %v2012 = vmax.f32 %v1898, 0.0
        %v2013 = vmax.f32 %v1900, 0.0
        %v2014 = vmax.f32 %v1904, 0.0
        %v2015 = vmax.f32 %v1906, 0.0
        %v2016 = vmax.f32 %v1908, 0.0
        %v2017 = vmax.f32 %v1910, 0.0
        %v2018 = vmax.f32 %v1914, 0.0
        %v2019 = vmax.f32 %v1916, 0.0
        %v2020 = vmax.f32 %v1918, 0.0
        %v2021 = vmax.f32 %v1920, 0.0
        %v2022 = vmax.f32 %v1924, 0.0
        %v2023 = vmax.f32 %v1926, 0.0
        %v2024 = vmax.f32 %v1928, 0.0
        %v2025 = vmax.f32 %v1930, 0.0
        %v2026 = vmax.f32 %v1934, 0.0
        %v2027 = vmax.f32 %v1936, 0.0
        %v2028 = vmax.f32 %v1938, 0.0
        %v2029 = vmax.f32 %v1940, 0.0
        %v2030 = vmax.f32 %v1944, 0.0
        %v2031 = vmax.f32 %v1946, 0.0
        %v2032 = vmax.f32 %v1948, 0.0
        %v2033 = vmax.f32 %v1950, 0.0
        %v2034 = vmax.f32 %v1954, 0.0
        %v2035 = vmax.f32 %v1956, 0.0
        %v2036 = vmax.f32 %v1958, 0.0
        %v2037 = vmax.f32 %v1960, 0.0
        %v2038 = vmax.f32 %v1964, 0.0
        %v2039 = vmax.f32 %v1966, 0.0
        %v2040 = vmax.f32 %v1968, 0.0
        %v2041 = vmax.f32 %v1970, 0.0
        %v2042 = vmax.f32 %v1974, 0.0
        %v2043 = vmax.f32 %v1976, 0.0
        %v2044 = vmax.f32 %v1978, 0.0
        %v2045 = vmax.f32 %v1980, 0.0
        %v2046 = vpack.c.bf16 %v1984, %v1982
        %v2047 = vpack.c.bf16 %v1985, %v1983
        %v2048 = vpack.c.bf16 %v1988, %v1986
        %v2049 = vpack.c.bf16 %v1989, %v1987
        %v2050 = vpack.c.bf16 %v1992, %v1990
        %v2051 = vpack.c.bf16 %v1993, %v1991
        %v2052 = vpack.c.bf16 %v1996, %v1994
        %v2053 = vpack.c.bf16 %v1997, %v1995
        %v2054 = vpack.c.bf16 %v2000, %v1998
        %v2055 = vpack.c.bf16 %v2001, %v1999
        %v2056 = vpack.c.bf16 %v2004, %v2002
        %v2057 = vpack.c.bf16 %v2005, %v2003
        %v2058 = vpack.c.bf16 %v2008, %v2006
        %v2059 = vpack.c.bf16 %v2009, %v2007
        %v2060 = vpack.c.bf16 %v2012, %v2010
        %v2061 = vpack.c.bf16 %v2013, %v2011
        %v2062 = vpack.c.bf16 %v2016, %v2014
        %v2063 = vpack.c.bf16 %v2017, %v2015
        %v2064 = vpack.c.bf16 %v2020, %v2018
        %v2065 = vpack.c.bf16 %v2021, %v2019
        %v2066 = vpack.c.bf16 %v2024, %v2022
        %v2067 = vpack.c.bf16 %v2025, %v2023
        %v2068 = vpack.c.bf16 %v2028, %v2026
        %v2069 = vpack.c.bf16 %v2029, %v2027
        %v2070 = vpack.c.bf16 %v2032, %v2030
        %v2071 = vpack.c.bf16 %v2033, %v2031
        %v2072 = vpack.c.bf16 %v2036, %v2034
        %v2073 = vpack.c.bf16 %v2037, %v2035
        %v2074 = vpack.c.bf16 %v2040, %v2038
        %v2075 = vpack.c.bf16 %v2041, %v2039
        %v2076 = vpack.c.bf16 %v2044, %v2042
        %v2077 = vpack.c.bf16 %v2045, %v2043
        %v2078 = vld [vmem:[#allocation13] sm:$0xf]
        %v2079 = vld [vmem:[#allocation13 + $0x4] sm:$0xf]
        %v2080 = vld [vmem:[#allocation13 + $0x8] sm:$0xf]
        %v2081 = vld [vmem:[#allocation13 + $0xc] sm:$0xf]
        %v2082 = vld [vmem:[#allocation13 + $0x10] sm:$0xf]
        %v2083 = vld [vmem:[#allocation13 + $0x14] sm:$0xf]
        %v2084 = vld [vmem:[#allocation13 + $0x18] sm:$0xf]
        %v2085 = vld [vmem:[#allocation13 + $0x1c] sm:$0xf]
        %v2086 = vld [vmem:[#allocation13 + $0x20] sm:$0xf]
        %v2087 = vld [vmem:[#allocation13 + $0x24] sm:$0xf]
        %v2088 = vld [vmem:[#allocation13 + $0x28] sm:$0xf]
        %v2089 = vld [vmem:[#allocation13 + $0x2c] sm:$0xf]
        %v2090 = vld [vmem:[#allocation13 + $0x30] sm:$0xf]
        %v2091 = vld [vmem:[#allocation13 + $0x34] sm:$0xf]
        %v2092 = vld [vmem:[#allocation13 + $0x38] sm:$0xf]
        %v2093 = vld [vmem:[#allocation13 + $0x3c] sm:$0xf]
        %v2094 = vld [vmem:[#allocation13 + $0x40] sm:$0xf]
        %v2095 = vld [vmem:[#allocation13 + $0x44] sm:$0xf]
        %v2096 = vld [vmem:[#allocation13 + $0x48] sm:$0xf]
        %v2097 = vld [vmem:[#allocation13 + $0x4c] sm:$0xf]
        %v2098 = vld [vmem:[#allocation13 + $0x50] sm:$0xf]
        %v2099 = vld [vmem:[#allocation13 + $0x54] sm:$0xf]
        %v2100 = vld [vmem:[#allocation13 + $0x58] sm:$0xf]
        %v2101 = vld [vmem:[#allocation13 + $0x5c] sm:$0xf]
        %v2102 = vld [vmem:[#allocation13 + $0x60] sm:$0xf]
        %v2103 = vld [vmem:[#allocation13 + $0x64] sm:$0xf]
        %v2104 = vld [vmem:[#allocation13 + $0x68] sm:$0xf]
        %v2105 = vld [vmem:[#allocation13 + $0x6c] sm:$0xf]
        %v2106 = vld [vmem:[#allocation13 + $0x70] sm:$0xf]
        %v2107 = vld [vmem:[#allocation13 + $0x74] sm:$0xf]
        %v2108 = vld [vmem:[#allocation13 + $0x78] sm:$0xf]
        %v2109 = vld [vmem:[#allocation13 + $0x7c] sm:$0xf]
        %v2110 = vld [vmem:[%s10] sm:$0x1]
        %v2112 = vlaneseq
        %v2113 = vshrl.u32 %v2112, 7
        %v2114 = vsub.s32 0, %v2113
        %v2115 = vrot.slane %v2110, %v2114
        %v2149 = vunpack.c.l.b16 %v2078
        %v2150 = vunpack.c.l.b16 %v2079
        %v2151 = vunpack.c.l.b16 %v2080
        %v2152 = vunpack.c.l.b16 %v2081
        %v2153 = vunpack.c.l.b16 %v2082
        %v2154 = vunpack.c.l.b16 %v2083
        %v2155 = vunpack.c.l.b16 %v2084
        %v2156 = vunpack.c.l.b16 %v2085
        %v2157 = vunpack.c.l.b16 %v2086
        %v2158 = vunpack.c.l.b16 %v2087
        %v2159 = vunpack.c.l.b16 %v2088
        %v2160 = vunpack.c.l.b16 %v2089
        %v2161 = vunpack.c.l.b16 %v2090
        %v2162 = vunpack.c.l.b16 %v2091
        %v2163 = vunpack.c.l.b16 %v2092
        %v2164 = vunpack.c.l.b16 %v2093
        %v2165 = vunpack.c.l.b16 %v2094
        %v2166 = vunpack.c.l.b16 %v2095
        %v2167 = vunpack.c.l.b16 %v2096
        %v2168 = vunpack.c.l.b16 %v2097
        %v2169 = vunpack.c.l.b16 %v2098
        %v2170 = vunpack.c.l.b16 %v2099
        %v2171 = vunpack.c.l.b16 %v2100
        %v2172 = vunpack.c.l.b16 %v2101
        %v2173 = vunpack.c.l.b16 %v2102
        %v2174 = vunpack.c.l.b16 %v2103
        %v2175 = vunpack.c.l.b16 %v2104
        %v2176 = vunpack.c.l.b16 %v2105
        %v2177 = vunpack.c.l.b16 %v2106
        %v2178 = vunpack.c.l.b16 %v2107
        %v2179 = vunpack.c.l.b16 %v2108
        %v2180 = vunpack.c.l.b16 %v2109
        %v2181 = vpack.c.b16 %v2150, %v2149
        %v2182 = vpack.c.b16 %v2152, %v2151
        %v2183 = vpack.c.b16 %v2154, %v2153
        %v2184 = vpack.c.b16 %v2156, %v2155
        %v2185 = vpack.c.b16 %v2158, %v2157
        %v2186 = vpack.c.b16 %v2160, %v2159
        %v2187 = vpack.c.b16 %v2162, %v2161
        %v2188 = vpack.c.b16 %v2164, %v2163
        %v2189 = vpack.c.b16 %v2166, %v2165
        %v2190 = vpack.c.b16 %v2168, %v2167
        %v2191 = vpack.c.b16 %v2170, %v2169
        %v2192 = vpack.c.b16 %v2172, %v2171
        %v2193 = vpack.c.b16 %v2174, %v2173
        %v2194 = vpack.c.b16 %v2176, %v2175
        %v2195 = vpack.c.b16 %v2178, %v2177
        %v2196 = vpack.c.b16 %v2180, %v2179
        %2213 = vmatprep.subr.bf16.mxu0 0
        %2214 = vmatpush1.bf16.msra.mxu0 %v2188
        %2215 = vmatprep.subr.bf16.mxu0 0
        %2216 = vmatpush1.bf16.msra.mxu0 %v2187
        %2217 = vmatprep.subr.bf16.mxu0 0
        %2218 = vmatpush1.bf16.msra.mxu0 %v2186
        %2219 = vmatprep.subr.bf16.mxu0 0
        %2220 = vmatpush1.bf16.msra.mxu0 %v2185
        %2221 = vmatprep.subr.bf16.mxu0 0
        %2222 = vmatpush1.bf16.msra.mxu0 %v2184
        %2223 = vmatprep.subr.bf16.mxu0 0
        %2224 = vmatpush1.bf16.msra.mxu0 %v2183
        %2225 = vmatprep.subr.bf16.mxu0 0
        %2226 = vmatpush1.bf16.msra.mxu0 %v2182
        %2227 = vmatprep.subr.bf16.mxu0 0
        %2228 = vmatpush1.bf16.msra.mxu0 %v2181
        %2229 = vmatprep.subr.bf16.mxu0 0
        %2230 = vmatpush2.bf16.msra.mxu0 %v2196
        %2231 = vmatprep.subr.bf16.mxu0 0
        %2232 = vmatpush2.bf16.msra.mxu0 %v2195
        %2233 = vmatprep.subr.bf16.mxu0 0
        %2234 = vmatpush2.bf16.msra.mxu0 %v2194
        %2235 = vmatprep.subr.bf16.mxu0 0
        %2236 = vmatpush2.bf16.msra.mxu0 %v2193
        %2237 = vmatprep.subr.bf16.mxu0 0
        %2238 = vmatpush2.bf16.msra.mxu0 %v2192
        %2239 = vmatprep.subr.bf16.mxu0 0
        %2240 = vmatpush2.bf16.msra.mxu0 %v2191
        %2241 = vmatprep.subr.bf16.mxu0 0
        %2242 = vmatpush2.bf16.msra.mxu0 %v2190
        %2243 = vmatprep.subr.bf16.mxu0 0
        %2244 = vmatpush2.bf16.msra.mxu0 %v2189
        %2245 = vmatprep.mubr.bf16.mxu0 %v2047
        %2246 = vmatmul.mubr.bf16.gmra.mxu0 %v2046
        %v2247 = vpop.f32.mrf.mxu0
        %v2248 = vadd.f32 %v2115, %v2247
        %v2249 = vpop.f32.mrf.mxu0
        %v2250 = vpop.f32.mrf.mxu0
        %v2251 = vadd.f32 %v2115, %v2250
        %v2252 = vpop.f32.mrf.mxu0
        %2253 = vmatprep.mubr.bf16.mxu0 %v2049
        %2254 = vmatmul.mubr.bf16.gmra.mxu0 %v2048
        %v2255 = vpop.f32.mrf.mxu0
        %v2256 = vadd.f32 %v2115, %v2255
        %v2257 = vpop.f32.mrf.mxu0
        %v2258 = vpop.f32.mrf.mxu0
        %v2259 = vadd.f32 %v2115, %v2258
        %v2260 = vpop.f32.mrf.mxu0
        %2261 = vmatprep.mubr.bf16.mxu0 %v2051
        %2262 = vmatmul.mubr.bf16.gmra.mxu0 %v2050
        %v2263 = vpop.f32.mrf.mxu0
        %v2264 = vadd.f32 %v2115, %v2263
        %v2265 = vpop.f32.mrf.mxu0
        %v2266 = vpop.f32.mrf.mxu0
        %v2267 = vadd.f32 %v2115, %v2266
        %v2268 = vpop.f32.mrf.mxu0
        %2269 = vmatprep.mubr.bf16.mxu0 %v2053
        %2270 = vmatmul.mubr.bf16.gmra.mxu0 %v2052
        %v2271 = vpop.f32.mrf.mxu0
        %v2272 = vadd.f32 %v2115, %v2271
        %v2273 = vpop.f32.mrf.mxu0
        %v2274 = vpop.f32.mrf.mxu0
        %v2275 = vadd.f32 %v2115, %v2274
        %v2276 = vpop.f32.mrf.mxu0
        %2277 = vmatprep.mubr.bf16.mxu0 %v2055
        %2278 = vmatmul.mubr.bf16.gmra.mxu0 %v2054
        %v2279 = vpop.f32.mrf.mxu0
        %v2280 = vadd.f32 %v2115, %v2279
        %v2281 = vpop.f32.mrf.mxu0
        %v2282 = vpop.f32.mrf.mxu0
        %v2283 = vadd.f32 %v2115, %v2282
        %v2284 = vpop.f32.mrf.mxu0
        %2285 = vmatprep.mubr.bf16.mxu0 %v2057
        %2286 = vmatmul.mubr.bf16.gmra.mxu0 %v2056
        %v2287 = vpop.f32.mrf.mxu0
        %v2288 = vadd.f32 %v2115, %v2287
        %v2289 = vpop.f32.mrf.mxu0
        %v2290 = vpop.f32.mrf.mxu0
        %v2291 = vadd.f32 %v2115, %v2290
        %v2292 = vpop.f32.mrf.mxu0
        %2293 = vmatprep.mubr.bf16.mxu0 %v2059
        %2294 = vmatmul.mubr.bf16.gmra.mxu0 %v2058
        %v2295 = vpop.f32.mrf.mxu0
        %v2296 = vadd.f32 %v2115, %v2295
        %v2297 = vpop.f32.mrf.mxu0
        %v2298 = vpop.f32.mrf.mxu0
        %v2299 = vadd.f32 %v2115, %v2298
        %v2300 = vpop.f32.mrf.mxu0
        %2301 = vmatprep.mubr.bf16.mxu0 %v2061
        %2302 = vmatmul.mubr.bf16.gmra.mxu0 %v2060
        %v2303 = vpop.f32.mrf.mxu0
        %v2304 = vadd.f32 %v2115, %v2303
        %v2305 = vpop.f32.mrf.mxu0
        %v2306 = vpop.f32.mrf.mxu0
        %v2307 = vadd.f32 %v2115, %v2306
        %v2308 = vpop.f32.mrf.mxu0
        %2309 = vmatprep.mubr.bf16.mxu0 %v2063
        %2310 = vmatmul.mubr.bf16.gmra.mxu0 %v2062
        %v2311 = vpop.f32.mrf.mxu0
        %v2312 = vadd.f32 %v2115, %v2311
        %v2313 = vpop.f32.mrf.mxu0
        %v2314 = vpop.f32.mrf.mxu0
        %v2315 = vadd.f32 %v2115, %v2314
        %v2316 = vpop.f32.mrf.mxu0
        %2317 = vmatprep.mubr.bf16.mxu0 %v2065
        %2318 = vmatmul.mubr.bf16.gmra.mxu0 %v2064
        %v2319 = vpop.f32.mrf.mxu0
        %v2320 = vadd.f32 %v2115, %v2319
        %v2321 = vpop.f32.mrf.mxu0
        %v2322 = vpop.f32.mrf.mxu0
        %v2323 = vadd.f32 %v2115, %v2322
        %v2324 = vpop.f32.mrf.mxu0
        %2325 = vmatprep.mubr.bf16.mxu0 %v2067
        %2326 = vmatmul.mubr.bf16.gmra.mxu0 %v2066
        %v2327 = vpop.f32.mrf.mxu0
        %v2328 = vadd.f32 %v2115, %v2327
        %v2329 = vpop.f32.mrf.mxu0
        %v2330 = vpop.f32.mrf.mxu0
        %v2331 = vadd.f32 %v2115, %v2330
        %v2332 = vpop.f32.mrf.mxu0
        %2333 = vmatprep.mubr.bf16.mxu0 %v2069
        %2334 = vmatmul.mubr.bf16.gmra.mxu0 %v2068
        %v2335 = vpop.f32.mrf.mxu0
        %v2336 = vadd.f32 %v2115, %v2335
        %v2337 = vpop.f32.mrf.mxu0
        %v2338 = vpop.f32.mrf.mxu0
        %v2339 = vadd.f32 %v2115, %v2338
        %v2340 = vpop.f32.mrf.mxu0
        %2341 = vmatprep.mubr.bf16.mxu0 %v2071
        %2342 = vmatmul.mubr.bf16.gmra.mxu0 %v2070
        %v2343 = vpop.f32.mrf.mxu0
        %v2344 = vadd.f32 %v2115, %v2343
        %v2345 = vpop.f32.mrf.mxu0
        %v2346 = vpop.f32.mrf.mxu0
        %v2347 = vadd.f32 %v2115, %v2346
        %v2348 = vpop.f32.mrf.mxu0
        %2349 = vmatprep.mubr.bf16.mxu0 %v2073
        %2350 = vmatmul.mubr.bf16.gmra.mxu0 %v2072
        %v2351 = vpop.f32.mrf.mxu0
        %v2352 = vadd.f32 %v2115, %v2351
        %v2353 = vpop.f32.mrf.mxu0
        %v2354 = vpop.f32.mrf.mxu0
        %v2355 = vadd.f32 %v2115, %v2354
        %v2356 = vpop.f32.mrf.mxu0
        %2357 = vmatprep.mubr.bf16.mxu0 %v2075
        %2358 = vmatmul.mubr.bf16.gmra.mxu0 %v2074
        %v2359 = vpop.f32.mrf.mxu0
        %v2360 = vadd.f32 %v2115, %v2359
        %v2361 = vpop.f32.mrf.mxu0
        %v2362 = vpop.f32.mrf.mxu0
        %v2363 = vadd.f32 %v2115, %v2362
        %v2364 = vpop.f32.mrf.mxu0
        %2365 = vmatprep.mubr.bf16.mxu0 %v2077
        %2366 = vmatmul.mubr.bf16.gmra.mxu0 %v2076
        %v2367 = vpop.f32.mrf.mxu0
        %v2368 = vadd.f32 %v2115, %v2367
        %v2369 = vpop.f32.mrf.mxu0
        %v2370 = vpop.f32.mrf.mxu0
        %v2371 = vadd.f32 %v2115, %v2370
        %v2372 = vpop.f32.mrf.mxu0
        %2373 = vdwg.mxu0
        %v2374 = vmax.f32 %v2248, 0.0
        %v2375 = vmax.f32 %v2251, 0.0
        %v2376 = vmax.f32 %v2256, 0.0
        %v2377 = vmax.f32 %v2259, 0.0
        %v2378 = vmax.f32 %v2264, 0.0
        %v2379 = vmax.f32 %v2267, 0.0
        %v2380 = vmax.f32 %v2272, 0.0
        %v2381 = vmax.f32 %v2275, 0.0
        %v2382 = vmax.f32 %v2280, 0.0
        %v2383 = vmax.f32 %v2283, 0.0
        %v2384 = vmax.f32 %v2288, 0.0
        %v2385 = vmax.f32 %v2291, 0.0
        %v2386 = vmax.f32 %v2296, 0.0
        %v2387 = vmax.f32 %v2299, 0.0
        %v2388 = vmax.f32 %v2304, 0.0
        %v2389 = vmax.f32 %v2307, 0.0
        %v2390 = vmax.f32 %v2312, 0.0
        %v2391 = vmax.f32 %v2315, 0.0
        %v2392 = vmax.f32 %v2320, 0.0
        %v2393 = vmax.f32 %v2323, 0.0
        %v2394 = vmax.f32 %v2328, 0.0
        %v2395 = vmax.f32 %v2331, 0.0
        %v2396 = vmax.f32 %v2336, 0.0
        %v2397 = vmax.f32 %v2339, 0.0
        %v2398 = vmax.f32 %v2344, 0.0
        %v2399 = vmax.f32 %v2347, 0.0
        %v2400 = vmax.f32 %v2352, 0.0
        %v2401 = vmax.f32 %v2355, 0.0
        %v2402 = vmax.f32 %v2360, 0.0
        %v2403 = vmax.f32 %v2363, 0.0
        %v2404 = vmax.f32 %v2368, 0.0
        %v2405 = vmax.f32 %v2371, 0.0
        %v2406 = vpack.c.bf16 %v2375, %v2374
        %v2407 = vpack.c.bf16 %v2377, %v2376
        %v2408 = vpack.c.bf16 %v2379, %v2378
        %v2409 = vpack.c.bf16 %v2381, %v2380
        %v2410 = vpack.c.bf16 %v2383, %v2382
        %v2411 = vpack.c.bf16 %v2385, %v2384
        %v2412 = vpack.c.bf16 %v2387, %v2386
        %v2413 = vpack.c.bf16 %v2389, %v2388
        %v2414 = vpack.c.bf16 %v2391, %v2390
        %v2415 = vpack.c.bf16 %v2393, %v2392
        %v2416 = vpack.c.bf16 %v2395, %v2394
        %v2417 = vpack.c.bf16 %v2397, %v2396
        %v2418 = vpack.c.bf16 %v2399, %v2398
        %v2419 = vpack.c.bf16 %v2401, %v2400
        %v2420 = vpack.c.bf16 %v2403, %v2402
        %v2421 = vpack.c.bf16 %v2405, %v2404
        %v2422 = vld [vmem:[#allocation14] sm:$0xf]
        %v2423 = vld [vmem:[#allocation14 + $0x4] sm:$0xf]
        %v2424 = vld [vmem:[#allocation14 + $0x8] sm:$0xf]
        %v2425 = vld [vmem:[#allocation14 + $0xc] sm:$0xf]
        %v2426 = vld [vmem:[#allocation14 + $0x10] sm:$0xf]
        %v2427 = vld [vmem:[#allocation14 + $0x14] sm:$0xf]
        %v2428 = vld [vmem:[#allocation14 + $0x18] sm:$0xf]
        %v2429 = vld [vmem:[#allocation14 + $0x1c] sm:$0xf]
        %v2430 = vld [vmem:[#allocation14 + $0x20] sm:$0xf]
        %v2431 = vld [vmem:[#allocation14 + $0x24] sm:$0xf]
        %v2432 = vld [vmem:[#allocation14 + $0x28] sm:$0xf]
        %v2433 = vld [vmem:[#allocation14 + $0x2c] sm:$0xf]
        %v2434 = vld [vmem:[#allocation14 + $0x30] sm:$0xf]
        %v2435 = vld [vmem:[#allocation14 + $0x34] sm:$0xf]
        %v2436 = vld [vmem:[#allocation14 + $0x38] sm:$0xf]
        %v2437 = vld [vmem:[#allocation14 + $0x3c] sm:$0xf]
        %v2438 = vld [vmem:[%s12] sm:$0x1]
        %v2440 = vlaneseq
        %v2441 = vshrl.u32 %v2440, 7
        %v2442 = vsub.s32 0, %v2441
        %v2443 = vrot.slane %v2438, %v2442
        %v2461 = vunpack.c.l.b16 %v2422
        %v2462 = vunpack.c.l.b16 %v2423
        %v2463 = vunpack.c.l.b16 %v2424
        %v2464 = vunpack.c.l.b16 %v2425
        %v2465 = vunpack.c.l.b16 %v2426
        %v2466 = vunpack.c.l.b16 %v2427
        %v2467 = vunpack.c.l.b16 %v2428
        %v2468 = vunpack.c.l.b16 %v2429
        %v2469 = vunpack.c.l.b16 %v2430
        %v2470 = vunpack.c.l.b16 %v2431
        %v2471 = vunpack.c.l.b16 %v2432
        %v2472 = vunpack.c.l.b16 %v2433
        %v2473 = vunpack.c.l.b16 %v2434
        %v2474 = vunpack.c.l.b16 %v2435
        %v2475 = vunpack.c.l.b16 %v2436
        %v2476 = vunpack.c.l.b16 %v2437
        %v2477 = vpack.c.b16 %v2462, %v2461
        %v2478 = vpack.c.b16 %v2464, %v2463
        %v2479 = vpack.c.b16 %v2466, %v2465
        %v2480 = vpack.c.b16 %v2468, %v2467
        %v2481 = vpack.c.b16 %v2470, %v2469
        %v2482 = vpack.c.b16 %v2472, %v2471
        %v2483 = vpack.c.b16 %v2474, %v2473
        %v2484 = vpack.c.b16 %v2476, %v2475
        %2493 = vmatprep.subr.bf16.mxu0 0
        %2494 = vmatpush1.bf16.msra.mxu0 %v2484
        %2495 = vmatprep.subr.bf16.mxu0 0
        %2496 = vmatpush1.bf16.msra.mxu0 %v2483
        %2497 = vmatprep.subr.bf16.mxu0 0
        %2498 = vmatpush1.bf16.msra.mxu0 %v2482
        %2499 = vmatprep.subr.bf16.mxu0 0
        %2500 = vmatpush1.bf16.msra.mxu0 %v2481
        %2501 = vmatprep.subr.bf16.mxu0 0
        %2502 = vmatpush1.bf16.msra.mxu0 %v2480
        %2503 = vmatprep.subr.bf16.mxu0 0
        %2504 = vmatpush1.bf16.msra.mxu0 %v2479
        %2505 = vmatprep.subr.bf16.mxu0 0
        %2506 = vmatpush1.bf16.msra.mxu0 %v2478
        %2507 = vmatprep.subr.bf16.mxu0 0
        %2508 = vmatpush1.bf16.msra.mxu0 %v2477
        %2509 = vmatprep.subr.bf16.mxu0 0
        %2510 = vmatpush2.bf16.msra.mxu0 0
        %2511 = vmatprep.subr.bf16.mxu0 0
        %2512 = vmatpush2.bf16.msra.mxu0 0
        %2513 = vmatprep.subr.bf16.mxu0 0
        %2514 = vmatpush2.bf16.msra.mxu0 0
        %2515 = vmatprep.subr.bf16.mxu0 0
        %2516 = vmatpush2.bf16.msra.mxu0 0
        %2517 = vmatprep.subr.bf16.mxu0 0
        %2518 = vmatpush2.bf16.msra.mxu0 0
        %2519 = vmatprep.subr.bf16.mxu0 0
        %2520 = vmatpush2.bf16.msra.mxu0 0
        %2521 = vmatprep.subr.bf16.mxu0 0
        %2522 = vmatpush2.bf16.msra.mxu0 0
        %2523 = vmatprep.subr.bf16.mxu0 0
        %2524 = vmatpush2.bf16.msra.mxu0 0
        %2525 = vmatprep.mubr.bf16.mxu0 0
        %2526 = vmatmul.mubr.bf16.gmra.mxu0 %v2406
        %v2527 = vpop.f32.mrf.mxu0
        %v2528 = vadd.f32 %v2443, %v2527
        %v2529 = vpop.f32.mrf.mxu0
        %v2530 = vpop.f32.mrf.mxu0
        %v2531 = vadd.f32 %v2443, %v2530
        %v2532 = vpop.f32.mrf.mxu0
        %2533 = vmatprep.mubr.bf16.mxu0 0
        %2534 = vmatmul.mubr.bf16.gmra.mxu0 %v2407
        %v2535 = vpop.f32.mrf.mxu0
        %v2536 = vadd.f32 %v2443, %v2535
        %v2537 = vpop.f32.mrf.mxu0
        %v2538 = vpop.f32.mrf.mxu0
        %v2539 = vadd.f32 %v2443, %v2538
        %v2540 = vpop.f32.mrf.mxu0
        %2541 = vmatprep.mubr.bf16.mxu0 0
        %2542 = vmatmul.mubr.bf16.gmra.mxu0 %v2408
        %v2543 = vpop.f32.mrf.mxu0
        %v2544 = vadd.f32 %v2443, %v2543
        %v2545 = vpop.f32.mrf.mxu0
        %v2546 = vpop.f32.mrf.mxu0
        %v2547 = vadd.f32 %v2443, %v2546
        %v2548 = vpop.f32.mrf.mxu0
        %2549 = vmatprep.mubr.bf16.mxu0 0
        %2550 = vmatmul.mubr.bf16.gmra.mxu0 %v2409
        %v2551 = vpop.f32.mrf.mxu0
        %v2552 = vadd.f32 %v2443, %v2551
        %v2553 = vpop.f32.mrf.mxu0
        %v2554 = vpop.f32.mrf.mxu0
        %v2555 = vadd.f32 %v2443, %v2554
        %v2556 = vpop.f32.mrf.mxu0
        %2557 = vmatprep.mubr.bf16.mxu0 0
        %2558 = vmatmul.mubr.bf16.gmra.mxu0 %v2410
        %v2559 = vpop.f32.mrf.mxu0
        %v2560 = vadd.f32 %v2443, %v2559
        %v2561 = vpop.f32.mrf.mxu0
        %v2562 = vpop.f32.mrf.mxu0
        %v2563 = vadd.f32 %v2443, %v2562
        %v2564 = vpop.f32.mrf.mxu0
        %2565 = vmatprep.mubr.bf16.mxu0 0
        %2566 = vmatmul.mubr.bf16.gmra.mxu0 %v2411
        %v2567 = vpop.f32.mrf.mxu0
        %v2568 = vadd.f32 %v2443, %v2567
        %v2569 = vpop.f32.mrf.mxu0
        %v2570 = vpop.f32.mrf.mxu0
        %v2571 = vadd.f32 %v2443, %v2570
        %v2572 = vpop.f32.mrf.mxu0
        %2573 = vmatprep.mubr.bf16.mxu0 0
        %2574 = vmatmul.mubr.bf16.gmra.mxu0 %v2412
        %v2575 = vpop.f32.mrf.mxu0
        %v2576 = vadd.f32 %v2443, %v2575
        %v2577 = vpop.f32.mrf.mxu0
        %v2578 = vpop.f32.mrf.mxu0
        %v2579 = vadd.f32 %v2443, %v2578
        %v2580 = vpop.f32.mrf.mxu0
        %2581 = vmatprep.mubr.bf16.mxu0 0
        %2582 = vmatmul.mubr.bf16.gmra.mxu0 %v2413
        %v2583 = vpop.f32.mrf.mxu0
        %v2584 = vadd.f32 %v2443, %v2583
        %v2585 = vpop.f32.mrf.mxu0
        %v2586 = vpop.f32.mrf.mxu0
        %v2587 = vadd.f32 %v2443, %v2586
        %v2588 = vpop.f32.mrf.mxu0
        %2589 = vmatprep.mubr.bf16.mxu0 0
        %2590 = vmatmul.mubr.bf16.gmra.mxu0 %v2414
        %v2591 = vpop.f32.mrf.mxu0
        %v2592 = vadd.f32 %v2443, %v2591
        %v2593 = vpop.f32.mrf.mxu0
        %v2594 = vpop.f32.mrf.mxu0
        %v2595 = vadd.f32 %v2443, %v2594
        %v2596 = vpop.f32.mrf.mxu0
        %2597 = vmatprep.mubr.bf16.mxu0 0
        %2598 = vmatmul.mubr.bf16.gmra.mxu0 %v2415
        %v2599 = vpop.f32.mrf.mxu0
        %v2600 = vadd.f32 %v2443, %v2599
        %v2601 = vpop.f32.mrf.mxu0
        %v2602 = vpop.f32.mrf.mxu0
        %v2603 = vadd.f32 %v2443, %v2602
        %v2604 = vpop.f32.mrf.mxu0
        %2605 = vmatprep.mubr.bf16.mxu0 0
        %2606 = vmatmul.mubr.bf16.gmra.mxu0 %v2416
        %v2607 = vpop.f32.mrf.mxu0
        %v2608 = vadd.f32 %v2443, %v2607
        %v2609 = vpop.f32.mrf.mxu0
        %v2610 = vpop.f32.mrf.mxu0
        %v2611 = vadd.f32 %v2443, %v2610
        %v2612 = vpop.f32.mrf.mxu0
        %2613 = vmatprep.mubr.bf16.mxu0 0
        %2614 = vmatmul.mubr.bf16.gmra.mxu0 %v2417
        %v2615 = vpop.f32.mrf.mxu0
        %v2616 = vadd.f32 %v2443, %v2615
        %v2617 = vpop.f32.mrf.mxu0
        %v2618 = vpop.f32.mrf.mxu0
        %v2619 = vadd.f32 %v2443, %v2618
        %v2620 = vpop.f32.mrf.mxu0
        %2621 = vmatprep.mubr.bf16.mxu0 0
        %2622 = vmatmul.mubr.bf16.gmra.mxu0 %v2418
        %v2623 = vpop.f32.mrf.mxu0
        %v2624 = vadd.f32 %v2443, %v2623
        %v2625 = vpop.f32.mrf.mxu0
        %v2626 = vpop.f32.mrf.mxu0
        %v2627 = vadd.f32 %v2443, %v2626
        %v2628 = vpop.f32.mrf.mxu0
        %2629 = vmatprep.mubr.bf16.mxu0 0
        %2630 = vmatmul.mubr.bf16.gmra.mxu0 %v2419
        %v2631 = vpop.f32.mrf.mxu0
        %v2632 = vadd.f32 %v2443, %v2631
        %v2633 = vpop.f32.mrf.mxu0
        %v2634 = vpop.f32.mrf.mxu0
        %v2635 = vadd.f32 %v2443, %v2634
        %v2636 = vpop.f32.mrf.mxu0
        %2637 = vmatprep.mubr.bf16.mxu0 0
        %2638 = vmatmul.mubr.bf16.gmra.mxu0 %v2420
        %v2639 = vpop.f32.mrf.mxu0
        %v2640 = vadd.f32 %v2443, %v2639
        %v2641 = vpop.f32.mrf.mxu0
        %v2642 = vpop.f32.mrf.mxu0
        %v2643 = vadd.f32 %v2443, %v2642
        %v2644 = vpop.f32.mrf.mxu0
        %2645 = vmatprep.mubr.bf16.mxu0 0
        %2646 = vmatmul.mubr.bf16.gmra.mxu0 %v2421
        %v2647 = vpop.f32.mrf.mxu0
        %v2648 = vadd.f32 %v2443, %v2647
        %v2649 = vpop.f32.mrf.mxu0
        %v2650 = vpop.f32.mrf.mxu0
        %v2651 = vadd.f32 %v2443, %v2650
        %v2652 = vpop.f32.mrf.mxu0
        %2653 = vdwg.mxu0
        %v2654 = vstv %s569
        %v2655 = vmul.f32 %v2654, %v607
        %v2656 = vmul.f32 %v2654, %v608
        %v2657 = vmul.f32 %v2654, %v609
        %v2658 = vmul.f32 %v2654, %v610
        %v2659 = vmul.f32 %v2654, %v611
        %v2660 = vmul.f32 %v2654, %v612
        %v2661 = vmul.f32 %v2654, %v613
        %v2662 = vmul.f32 %v2654, %v614
        %v2663 = vmul.f32 %v2654, %v615
        %v2664 = vmul.f32 %v2654, %v616
        %v2665 = vmul.f32 %v2654, %v617
        %v2666 = vmul.f32 %v2654, %v618
        %v2667 = vmul.f32 %v2654, %v619
        %v2668 = vmul.f32 %v2654, %v620
        %v2669 = vmul.f32 %v2654, %v621
        %v2670 = vmul.f32 %v2654, %v622
        %v2671 = vmul.f32 %v2654, %v623
        %v2672 = vmul.f32 %v2654, %v624
        %v2673 = vmul.f32 %v2654, %v625
        %v2674 = vmul.f32 %v2654, %v626
        %v2675 = vmul.f32 %v2654, %v627
        %v2676 = vmul.f32 %v2654, %v628
        %v2677 = vmul.f32 %v2654, %v629
        %v2678 = vmul.f32 %v2654, %v630
        %v2679 = vmul.f32 %v2654, %v631
        %v2680 = vmul.f32 %v2654, %v632
        %v2681 = vmul.f32 %v2654, %v633
        %v2682 = vmul.f32 %v2654, %v634
        %v2683 = vmul.f32 %v2654, %v635
        %v2684 = vmul.f32 %v2654, %v636
        %v2685 = vmul.f32 %v2654, %v637
        %v2686 = vmul.f32 %v2654, %v638
        %v2687 = vsub.f32 %v2528, %v2655
        %v2688 = vsub.f32 %v2531, %v2656
        %v2689 = vsub.f32 %v2536, %v2657
        %v2690 = vsub.f32 %v2539, %v2658
        %v2691 = vsub.f32 %v2544, %v2659
        %v2692 = vsub.f32 %v2547, %v2660
        %v2693 = vsub.f32 %v2552, %v2661
        %v2694 = vsub.f32 %v2555, %v2662
        %v2695 = vsub.f32 %v2560, %v2663
        %v2696 = vsub.f32 %v2563, %v2664
        %v2697 = vsub.f32 %v2568, %v2665
        %v2698 = vsub.f32 %v2571, %v2666
        %v2699 = vsub.f32 %v2576, %v2667
        %v2700 = vsub.f32 %v2579, %v2668
        %v2701 = vsub.f32 %v2584, %v2669
        %v2702 = vsub.f32 %v2587, %v2670
        %v2703 = vsub.f32 %v2592, %v2671
        %v2704 = vsub.f32 %v2595, %v2672
        %v2705 = vsub.f32 %v2600, %v2673
        %v2706 = vsub.f32 %v2603, %v2674
        %v2707 = vsub.f32 %v2608, %v2675
        %v2708 = vsub.f32 %v2611, %v2676
        %v2709 = vsub.f32 %v2616, %v2677
        %v2710 = vsub.f32 %v2619, %v2678
        %v2711 = vsub.f32 %v2624, %v2679
        %v2712 = vsub.f32 %v2627, %v2680
        %v2713 = vsub.f32 %v2632, %v2681
        %v2714 = vsub.f32 %v2635, %v2682
        %v2715 = vsub.f32 %v2640, %v2683
        %v2716 = vsub.f32 %v2643, %v2684
        %v2717 = vsub.f32 %v2648, %v2685
        %v2718 = vsub.f32 %v2651, %v2686
        %2719 = vst [vmem:[%s564] sm:$0xff] %v2687
        %2720 = vst [vmem:[%s564 + $0x8] sm:$0xff] %v2688
        %2721 = vst [vmem:[%s564 + $0x10] sm:$0xff] %v2689
        %2722 = vst [vmem:[%s564 + $0x18] sm:$0xff] %v2690
        %2723 = vst [vmem:[%s564 + $0x20] sm:$0xff] %v2691
        %2724 = vst [vmem:[%s564 + $0x28] sm:$0xff] %v2692
        %2725 = vst [vmem:[%s564 + $0x30] sm:$0xff] %v2693
        %2726 = vst [vmem:[%s564 + $0x38] sm:$0xff] %v2694
        %2727 = vst [vmem:[%s564 + $0x40] sm:$0xff] %v2695
        %2728 = vst [vmem:[%s564 + $0x48] sm:$0xff] %v2696
        %2729 = vst [vmem:[%s564 + $0x50] sm:$0xff] %v2697
        %2730 = vst [vmem:[%s564 + $0x58] sm:$0xff] %v2698
        %2731 = vst [vmem:[%s564 + $0x60] sm:$0xff] %v2699
        %2732 = vst [vmem:[%s564 + $0x68] sm:$0xff] %v2700
        %2733 = vst [vmem:[%s564 + $0x70] sm:$0xff] %v2701
        %2734 = vst [vmem:[%s564 + $0x78] sm:$0xff] %v2702
        %2735 = vst [vmem:[%s564 + $0x80] sm:$0xff] %v2703
        %2736 = vst [vmem:[%s564 + $0x88] sm:$0xff] %v2704
        %2737 = vst [vmem:[%s564 + $0x90] sm:$0xff] %v2705
        %2738 = vst [vmem:[%s564 + $0x98] sm:$0xff] %v2706
        %2739 = vst [vmem:[%s564 + $0xa0] sm:$0xff] %v2707
        %2740 = vst [vmem:[%s564 + $0xa8] sm:$0xff] %v2708
        %2741 = vst [vmem:[%s564 + $0xb0] sm:$0xff] %v2709
        %2742 = vst [vmem:[%s564 + $0xb8] sm:$0xff] %v2710
        %2743 = vst [vmem:[%s564 + $0xc0] sm:$0xff] %v2711
        %2744 = vst [vmem:[%s564 + $0xc8] sm:$0xff] %v2712
        %2745 = vst [vmem:[%s564 + $0xd0] sm:$0xff] %v2713
        %2746 = vst [vmem:[%s564 + $0xd8] sm:$0xff] %v2714
        %2747 = vst [vmem:[%s564 + $0xe0] sm:$0xff] %v2715
        %2748 = vst [vmem:[%s564 + $0xe8] sm:$0xff] %v2716
        %2749 = vst [vmem:[%s564 + $0xf0] sm:$0xff] %v2717
        %2750 = vst [vmem:[%s564 + $0xf8] sm:$0xff] %v2718
        %s2751 = sand.u32 %s337, 1
        %s2752 = scalar_lea.sflag [#allocation5], %s2751
        %s2753 = sand.u32 %s337, 1
        %s2754 = smul.addr %s2753, 256
        %s2755 = scalar_lea.vmem [#allocation16], %s2754
        // Predicated region
        $region101: #{scipy_ode_rhs_padded.1} parent=71 // pred_check
          %p2756 = pneg %p347
        $region102: #{scipy_ode_rhs_padded.1} parent=71 // pred_check_branch
          %2758 = sbr.rel (%p2756) target = $region104
        $region103: #{scipy_ode_rhs_padded.1} parent=71 // pred_region
          %s2759 = smul.u32 32, %s40
          %s2761 = ssub.s32 4096, 4096
          %2762 = vsyncadd %s2752, %s2761
          %s2763 = smul.addr %s39, 32
          %s2764 = sadd.s32 %s2759, %s2763
          %s2765 = smul.addr %s2764, 128
          %s2766 = scalar_lea.hbm %s13, %s2765
          %s2767 = sshll.u32 %s2755, 4
          %s2768 = int_to_ptr.vmem [resolvable:$true] %s2767
          %2773 = dma.vmem_to_hbm [thread:$0]  %s2768, 4096, %s2766, %s2752, 128, 128, 8
        $region104: #{scipy_ode_rhs_padded.1} parent=71 // pred_fallthru
          _
      $region72: #{scipy_ode_rhs_padded.1} parent=5 // pred_fallthru
        _
      %p2774 = scmp.le.s32.totalorder 2, %s30
      // Predicated region
      $region105: #{scipy_ode_rhs_padded.1} parent=5 // pred_check
        %p2775 = pneg %p2774
      $region106: #{scipy_ode_rhs_padded.1} parent=5 // pred_check_branch
        %2777 = sbr.rel (%p2775) target = $region108
      $region107: #{scipy_ode_rhs_padded.1} parent=5 // pred_region
        %s2778 = ssub.s32 %s30, 2
        // Predicated region
        $region109: #{scipy_ode_rhs_padded.1} parent=107 // pred_check
          %p2779 = pneg %p353
        $region110: #{scipy_ode_rhs_padded.1} parent=107 // pred_check_branch
          %2781 = sbr.rel (%p2779) target = $region112
        $region111: #{scipy_ode_rhs_padded.1} parent=107 // pred_region
          %s2782 = sand.u32 %s338, 1
          %s2783 = scalar_lea.sflag [#allocation5], %s2782
          %s2784 = sand.u32 %s338, 1
          %s2785 = smul.addr %s2784, 256
          %s2786 = scalar_lea.vmem [#allocation16], %s2785
          %2787 = dma.done %s2783, 4096
        $region112: #{scipy_ode_rhs_padded.1} parent=107 // pred_fallthru
          _
      $region108: #{scipy_ode_rhs_padded.1} parent=5 // pred_fallthru
        _
    $region6: #{scipy_ode_rhs_padded.1} parent=1 // loop_footer
      %s34 = sadd.s32 1, %s30
    $region7: #{scipy_ode_rhs_padded.1} parent=1 // loop_footer_branch
      %29 = sbr.rel target = $region3
    $region8: #{scipy_ode_rhs_padded.1} parent=1 // loop_exit
      _
    %2788 = vsyncpa [#allocation4], 1
    %s2789 = scalar_lea.sflag [#allocation4], 1
    %2790 = vsyncpa %s2789, 1
    %2791 = vsyncpa [#allocation9], 1
    %2792 = vsyncpa [#allocation12], 1
    %2793 = vsyncpa [#allocation15], 1
    %2794 = vsyncpa [#allocation5], 1
    %s2795 = scalar_lea.sflag [#allocation5], 1
    %2796 = vsyncpa %s2795, 1
    %2797 = vsyncpa [#allocation6], 1
    %s2798 = scalar_lea.sflag [#allocation6], 1
    %2799 = vsyncpa %s2798, 1

</llo_original>
